<compile_context>
chip_gen: v7x
topology: tpu7x:2x2x1
jax: 0.10.0
libtpu: 0.0.40
codegen_flags: <defaults>
</compile_context>

<pallas_src>
import functools

import jax
import jax.numpy as jnp
from jax import lax
from jax.experimental import pallas as pl
from jax.experimental.pallas import tpu as pltpu


# ----------------------------------------------------------------------------
# helpers
# ----------------------------------------------------------------------------
def _round_up(x, m):
    return (x + m - 1) // m * m


_VMEM_BUDGET = 12 * 1024 * 1024       # per-step slab+output footprint target
_ACC_BYTES = 96 * 1024                # per-sub-block f32 accumulator target


def _pick_tile_h(h, per_row_bytes, even=False):
    """Largest divisor of h (even if required) fitting the VMEM budget."""
    cands = [t for t in range(1, h + 1)
             if h % t == 0 and (not even or t % 2 == 0)]
    if not cands:
        cands = [1]
    best = cands[0]
    for t in cands:
        if t * per_row_bytes <= _VMEM_BUDGET:
            best = t
    return best


def _pick_sub_h(th, wa, cout):
    """Largest divisor of th keeping the f32 sub-accumulator near vregs."""
    limit = max(1, _ACC_BYTES // (wa * cout * 4))
    best = 1
    for s in range(1, th + 1):
        if th % s == 0 and s <= limit:
            best = s
    return best


def _vmem_limit(block_bytes):
    # v7x has 64 MiB VMEM/TC (v5e/v6e: 128 MiB); size from the footprint and
    # leave headroom instead of requesting a blanket 48 MiB.
    return int(min(40 << 20, max(8 << 20, 2 * block_bytes + (4 << 20))))


def _pad_reflect_flat(x, wa):
    """Reflection-pad (1,1), width-align to wa, add a zero tail row, flatten
    (batch, rows, cols) -> (batch*rows*cols,) so a grid step's window is one
    contiguous dynamic slice."""
    n, h, w, c = x.shape
    xp = jnp.pad(x, ((0, 0), (1, 1), (1, 1), (0, 0)), mode="reflect")
    xp = jnp.pad(xp, ((0, 0), (0, 1), (0, wa - (w + 2)), (0, 0)))
    return xp.reshape(n * (h + 3) * wa, c), (h + 3) * wa


def _pad_up_branch(y, wa):
    """Up-branch prep: width-nearest-2x + edge pad (rows stay half-res; the
    kernel duplicates rows in VMEM).  Returns (n*(h2+2), wa, c1)."""
    n, h2, w2, c = y.shape
    yw = jnp.repeat(y, 2, axis=2)                              # width 2x
    yp = jnp.pad(yw, ((0, 0), (1, 1), (1, 1), (0, 0)), mode="edge")
    yp = jnp.pad(yp, ((0, 0), (0, 0), (0, wa - (2 * w2 + 2)), (0, 0)))
    return yp.reshape(n * (h2 + 2), wa, c), (h2 + 2)


# ----------------------------------------------------------------------------
# kernel 1: plain 3x3 conv (reflection pad) + ELU or fused disp/bin head
# ----------------------------------------------------------------------------
def _conv3x3_kernel(th, wa, sub_h, lstride, act, ndisp, nbins,
                    x_hbm, w_ref, b_ref, o_ref, sbuf, sem):
    bi = pl.program_id(0)
    j = pl.program_id(1)
    n_t = pl.num_programs(1)
    lwin = sbuf.shape[1]
    cout = o_ref.shape[3]
    slot = j % 2

    def start(jn, sl):
        st = pl.multiple_of(bi * lstride + jn * th * wa, 8)
        pltpu.make_async_copy(x_hbm.at[pl.ds(st, lwin), :],
                              sbuf.at[sl], sem.at[sl]).start()

    @pl.when(j == 0)
    def _():
        start(0, 0)

    pltpu.make_async_copy(x_hbm.at[pl.ds(0, lwin), :],
                          sbuf.at[slot], sem.at[slot]).wait()

    @pl.when(j + 1 < n_t)
    def _():
        start(j + 1, 1 - slot)

    cur = sbuf.at[slot]
    sub_m = sub_h * wa
    for sb in range(th // sub_h):
        r0 = sb * sub_h
        acc = jnp.zeros((sub_m, cout), jnp.float32) + b_ref[...]
        for dy in range(3):
            for dx in range(3):
                off = (r0 + dy) * wa + dx
                acc = acc + jnp.dot(cur[pl.ds(off, sub_m), :],
                                    w_ref[dy * 3 + dx],
                                    preferred_element_type=jnp.float32)
        if act == "elu":                       # nn.ELU, alpha=1
            acc = jnp.where(acc > 0.0, acc,
                            jnp.exp(jnp.minimum(acc, 0.0)) - 1.0)
        elif act == "head":                    # sigmoid(disp) | softmax(bins)
            lane = lax.broadcasted_iota(jnp.int32, acc.shape, 1)
            is_disp = lane < ndisp
            is_bin = jnp.logical_and(lane >= ndisp, lane < ndisp + nbins)
            logits = jnp.where(is_bin, acc, -1e30)
            mx = jnp.max(logits, axis=-1, keepdims=True)
            e = jnp.exp(logits - mx)
            soft = e * pl.reciprocal(jnp.sum(e, axis=-1, keepdims=True),
                                     approx=True)
            sig = pl.reciprocal(1.0 + jnp.exp(-acc), approx=True)
            acc = jnp.where(is_disp, sig, soft)
        o_ref[0, pl.ds(r0, sub_h)] = acc.reshape(sub_h, wa, cout).astype(o_ref.dtype)


def _conv3x3(x, w, b, act="elu", ndisp=0, nbins=0, out_dtype=jnp.bfloat16):
    """Conv3x3 (reflection pad) + ELU / fused head, one Pallas kernel."""
    n, h, wd, cin = x.shape
    cout = w.shape[-1]
    wa = _round_up(wd + 2, 8)
    per_row = wa * 4 * (cin + cout) + 64
    th = _pick_tile_h(h, per_row)
    sub_h = _pick_sub_h(th, wa, cout)
    t = h // th
    lwin = (th + 2) * wa + 8

    xp, lstride = _pad_reflect_flat(x.astype(jnp.bfloat16), wa)
    w9 = w.reshape(9, cin, cout).astype(jnp.bfloat16)
    b2 = b.reshape(1, cout).astype(jnp.float32)

    fp = 2 * lwin * cin * 2 + 2 * th * wa * cout * 2 + 2 * w9.size * 2
    kern = functools.partial(_conv3x3_kernel, th, wa, sub_h, lstride,
                             act, ndisp, nbins)
    out = pl.pallas_call(
        kern,
        out_shape=jax.ShapeDtypeStruct((n, h, wa, cout), out_dtype),
        grid=(n, t),
        in_specs=[
            pl.BlockSpec(memory_space=pl.ANY),
            pl.BlockSpec(w9.shape, lambda i, j: (0, 0, 0)),
            pl.BlockSpec(b2.shape, lambda i, j: (0, 0)),
        ],
        out_specs=pl.BlockSpec((1, th, wa, cout), lambda i, j: (i, j, 0, 0)),
        scratch_shapes=[
            pltpu.VMEM((2, lwin, cin), jnp.bfloat16),
            pltpu.SemaphoreType.DMA((2,)),
        ],
        compiler_params=pltpu.CompilerParams(
            dimension_semantics=("parallel", "arbitrary"),
            vmem_limit_bytes=_vmem_limit(fp)),
    )(xp, w9, b2)
    return out[:, :, :wd, :]


# ----------------------------------------------------------------------------
# kernel 2: fused nearest-2x upsample [+ skip concat] + 3x3 conv + ELU
# ----------------------------------------------------------------------------
def _upconv_fused_kernel(th, wa, sub_h, has_skip, ystride, sstride, *refs):
    if has_skip:
        (y_hbm, s_hbm, wu_ref, ws_ref, b_ref, o_ref,
         ybuf, upscr, sbuf, ysem, ssem) = refs
    else:
        (y_hbm, wu_ref, b_ref, o_ref, ybuf, upscr, ysem) = refs
        s_hbm = ws_ref = sbuf = ssem = None

    bi = pl.program_id(0)
    j = pl.program_id(1)
    n_t = pl.num_programs(1)
    slot = j % 2
    th2 = th // 2
    cout = o_ref.shape[3]
    c1 = ybuf.shape[3]
    lwin_s = sbuf.shape[1] if has_skip else 0

    def start(jn, sl):
        pltpu.make_async_copy(y_hbm.at[pl.ds(bi * ystride + jn * th2, th2 + 2)],
                              ybuf.at[sl], ysem.at[sl]).start()
        if has_skip:
            st = pl.multiple_of(bi * sstride + jn * th * wa, 8)
            pltpu.make_async_copy(s_hbm.at[pl.ds(st, lwin_s), :],
                                  sbuf.at[sl], ssem.at[sl]).start()

    @pl.when(j == 0)
    def _():
        start(0, 0)

    pltpu.make_async_copy(y_hbm.at[pl.ds(0, th2 + 2)],
                          ybuf.at[slot], ysem.at[slot]).wait()
    if has_skip:
        pltpu.make_async_copy(s_hbm.at[pl.ds(0, lwin_s), :],
                              sbuf.at[slot], ssem.at[slot]).wait()

    @pl.when(j + 1 < n_t)
    def _():
        start(j + 1, 1 - slot)

    # nearest-2x ROW upsample of the half-res window, entirely in VMEM
    # (width was pre-doubled in the wrapper); never touches HBM.
    yw = ybuf[slot]                                   # (th2+2, wa, c1)
    u = jnp.repeat(yw, 2, axis=0)                     # (th+4,  wa, c1)
    upscr[...] = u[1:th + 4].reshape((th + 3) * wa, c1)

    scur = sbuf.at[slot] if has_skip else None
    sub_m = sub_h * wa
    for sb in range(th // sub_h):
        r0 = sb * sub_h
        acc = jnp.zeros((sub_m, cout), jnp.float32) + b_ref[...]
        for dy in range(3):
            for dx in range(3):
                off = (r0 + dy) * wa + dx
                k = dy * 3 + dx
                acc = acc + jnp.dot(upscr[pl.ds(off, sub_m), :], wu_ref[k],
                                    preferred_element_type=jnp.float32)
                if has_skip:
                    acc = acc + jnp.dot(scur[pl.ds(off, sub_m), :], ws_ref[k],
                                        preferred_element_type=jnp.float32)
        acc = jnp.where(acc > 0.0, acc, jnp.exp(jnp.minimum(acc, 0.0)) - 1.0)
        o_ref[0, pl.ds(r0, sub_h)] = acc.reshape(sub_h, wa, cout).astype(o_ref.dtype)


def _upconv_fused(y, skip, w, b, out_dtype=jnp.bfloat16):
    """upsample2x(y) [concat skip] -> Conv3x3(reflect) -> ELU, fused."""
    n, h2, w2, c1 = y.shape
    h, wd = 2 * h2, 2 * w2
    has_skip = skip is not None
    c2 = skip.shape[-1] if has_skip else 0
    cout = w.shape[-1]
    assert w.shape[2] == c1 + c2

    wa = _round_up(wd + 2, 8)
    per_row = wa * (4 * c1 + 4 * c2 + 4 * cout) + 64
    th = _pick_tile_h(h, per_row, even=True)
    sub_h = _pick_sub_h(th, wa, cout)
    t = h // th
    th2 = th // 2
    lwin_s = (th + 2) * wa + 8

    yp, ystride = _pad_up_branch(y.astype(jnp.bfloat16), wa)
    wu = w[:, :, :c1, :].reshape(9, c1, cout).astype(jnp.bfloat16)
    b2 = b.reshape(1, cout).astype(jnp.float32)

    if has_skip:
        sp, sstride = _pad_reflect_flat(skip.astype(jnp.bfloat16), wa)
        ws = w[:, :, c1:, :].reshape(9, c2, cout).astype(jnp.bfloat16)
        in_arrays = [yp, sp, wu, ws, b2]
        in_specs = [
            pl.BlockSpec(memory_space=pl.ANY),
            pl.BlockSpec(memory_space=pl.ANY),
            pl.BlockSpec(wu.shape, lambda i, j: (0, 0, 0)),
            pl.BlockSpec(ws.shape, lambda i, j: (0, 0, 0)),
            pl.BlockSpec(b2.shape, lambda i, j: (0, 0)),
        ]
        scratch = [
            pltpu.VMEM((2, th2 + 2, wa, c1), jnp.bfloat16),
            pltpu.VMEM(((th + 3) * wa, c1), jnp.bfloat16),
            pltpu.VMEM((2, lwin_s, c2), jnp.bfloat16),
            pltpu.SemaphoreType.DMA((2,)),
            pltpu.SemaphoreType.DMA((2,)),
        ]
    else:
        sstride = 0
        in_arrays = [yp, wu, b2]
        in_specs = [
            pl.BlockSpec(memory_space=pl.ANY),
            pl.BlockSpec(wu.shape, lambda i, j: (0, 0, 0)),
            pl.BlockSpec(b2.shape, lambda i, j: (0, 0)),
        ]
        scratch = [
            pltpu.VMEM((2, th2 + 2, wa, c1), jnp.bfloat16),
            pltpu.VMEM(((th + 3) * wa, c1), jnp.bfloat16),
            pltpu.SemaphoreType.DMA((2,)),
        ]

    fp = (2 * (th2 + 2) * wa * c1 * 2 + (th + 3) * wa * c1 * 2
          + (2 * lwin_s * c2 * 2 if has_skip else 0)
          + 2 * th * wa * cout * 2 + 2 * 9 * (c1 + c2) * cout * 2)
    kern = functools.partial(_upconv_fused_kernel, th, wa, sub_h, has_skip,
                             ystride, sstride)
    out = pl.pallas_call(
        kern,
        out_shape=jax.ShapeDtypeStruct((n, h, wa, cout), out_dtype),
        grid=(n, t),
        in_specs=in_specs,
        out_specs=pl.BlockSpec((1, th, wa, cout), lambda i, j: (i, j, 0, 0)),
        scratch_shapes=scratch,
        compiler_params=pltpu.CompilerParams(
            dimension_semantics=("parallel", "arbitrary"),
            vmem_limit_bytes=_vmem_limit(fp)),
    )(*in_arrays)
    return out[:, :, :wd, :]


# ----------------------------------------------------------------------------
# DepthDecoderbin
# ----------------------------------------------------------------------------
class DepthDecoderBinPallas:
    def __init__(self, num_ch_enc, scales=range(4), num_output_channels=1,
                 use_skips=True, mono_bins=96, key=None):
        self.num_ch_enc = list(num_ch_enc)
        self.num_ch_dec = [16, 32, 64, 128, 256]
        self.scales = list(scales)
        self.num_output_channels = num_output_channels
        self.use_skips = use_skips
        self.mono_bins = mono_bins

        if key is None:
            key = jax.random.PRNGKey(0)
        keys = iter(jax.random.split(key, 64))

        def init_conv(cin, cout):
            k = next(keys)
            w = (jax.random.normal(k, (3, 3, cin, cout), jnp.float32)
                 / float((cin * 9) ** 0.5))
            b = jnp.zeros((cout,), jnp.float32)
            return w, b

        self.params = {}
        for i in range(4, -1, -1):
            cin = self.num_ch_enc[-1] if i == 4 else self.num_ch_dec[i + 1]
            self.params[("upconv", i, 0)] = init_conv(cin, self.num_ch_dec[i])
            cin = self.num_ch_dec[i]
            if self.use_skips and i > 0:
                cin += self.num_ch_enc[i - 1]
            self.params[("upconv", i, 1)] = init_conv(cin, self.num_ch_dec[i])
        for s in self.scales:
            self.params[("dispconv", s)] = init_conv(
                self.num_ch_dec[s], self.num_output_channels)
            self.params[("binconv", s)] = init_conv(
                self.num_ch_dec[s], self.mono_bins)

    def __call__(self, input_features_nchw):
        # NCHW -> NHWC (+ bf16 matmul operands) at the boundary (XLA glue).
        feats = [jnp.transpose(f, (0, 2, 3, 1)).astype(jnp.bfloat16)
                 for f in input_features_nchw]
        nd, nb = self.num_output_channels, self.mono_bins
        cout_head = _round_up(nd + nb, 128)      # lane-dense fused head output
        outputs = {}
        x = feats[-1]
        for i in range(4, -1, -1):
            w0, b0 = self.params[("upconv", i, 0)]
            x = _conv3x3(x, w0, b0, act="elu")           # ConvBlock
            skip = feats[i - 1] if (self.use_skips and i > 0) else None
            w1, b1 = self.params[("upconv", i, 1)]
            x = _upconv_fused(x, skip, w1, b1)           # up2x [+skip] + ConvBlock
            if i in self.scales:
                wd_, bd_ = self.params[("dispconv", i)]
                wb_, bb_ = self.params[("binconv", i)]
                cin = wd_.shape[2]
                cpad = cout_head - nd - nb
                wh = jnp.concatenate(
                    [wd_, wb_, jnp.zeros((3, 3, cin, cpad), wd_.dtype)], axis=-1)
                bh = jnp.concatenate([bd_, bb_, jnp.zeros((cpad,), bd_.dtype)])
                head = _conv3x3(x, wh, bh, act="head", ndisp=nd, nbins=nb)
                disp = head[..., :nd]                    # bf16 writeback
                bins = head[..., nd:nd + nb]
                outputs[("disp", i)] = jnp.transpose(disp, (0, 3, 1, 2))
                outputs[("bin", i)] = jnp.transpose(bins, (0, 3, 1, 2))
        return outputs


# ----------------------------------------------------------------------------
if __name__ == "__main__":
    key = jax.random.PRNGKey(0)
    keys = jax.random.split(key, 6)

    # Decoder-consistent small shapes: encoder features at H/2..H/32 of a
    # 64x64 image, channel widths num_ch_enc = [16, 32, 64, 128, 256].
    num_ch_enc = [16, 32, 64, 128, 256]
    N, base = 2, 64
    input_features = []
    for i, c in enumerate(num_ch_enc):
        s = base // (2 ** (i + 1))               # 32, 16, 8, 4, 2
        input_features.append(
            jax.random.normal(keys[i], (N, c, s, s), jnp.float32))

    decoder = DepthDecoderBinPallas(num_ch_enc, key=keys[5])
    outputs = decoder(input_features)

    for s in range(4):
        hs = base // (2 ** s)
        disp = jax.block_until_ready(outputs[("disp", s)]).astype(jnp.float32)
        bins = jax.block_until_ready(outputs[("bin", s)]).astype(jnp.float32)
        assert disp.shape == (N, 1, hs, hs), (s, disp.shape)
        assert bins.shape == (N, 96, hs, hs), (s, bins.shape)
        # sigmoid range (bf16 output + approx reciprocal -> small tolerance)
        assert bool(jnp.all((disp >= 0.0) & (disp <= 1.0 + 1e-2)))
        # channel softmax sums to ~1 (bf16 output tolerance)
        assert bool(jnp.all(jnp.abs(bins.sum(axis=1) - 1.0) < 2e-2))

    print("KERNEL_OK")
</pallas_src>

<mosaic_0001>
module attributes {stable_mosaic.version = 11 : i64} {
  func.func @_conv3x3_kernel(%arg0: i32, %arg1: i32, %arg2: memref<80x256xbf16, #tpu.memory_space<any>>, %arg3: memref<9x256x256xbf16, #tpu.memory_space<vmem>>, %arg4: memref<1x256xf32, #tpu.memory_space<vmem>>, %arg5: memref<1x2x8x256xbf16, #tpu.memory_space<vmem>>, %arg6: memref<2x40x256xbf16, #tpu.memory_space<vmem>>, %arg7: memref<2x!tpu.dma_semaphore, #tpu.memory_space<semaphore_mem>>) attributes {dimension_semantics = [#tpu.dimension_semantics<parallel>, #tpu.dimension_semantics<arbitrary>], iteration_bounds = array<i64: 2, 1>, scalar_prefetch = 0 : i64, scratch_operands = 2 : i64, tpu.core_type = #tpu.core_type<tc>, window_params = [{}, {pipeline_mode = #tpu.pipeline_mode<synchronous>, transform_indices = @transform_1, window_bounds = array<i64: 9, 256, 256>}, {pipeline_mode = #tpu.pipeline_mode<synchronous>, transform_indices = @transform_2, window_bounds = array<i64: 1, 256>}, {transform_indices = @transform_3, window_bounds = array<i64: 1, 2, 8, 256>}]} {
    %c2_i32 = arith.constant 2 : i32
    %c0_i32 = arith.constant 0 : i32
    %0 = arith.cmpi eq, %c2_i32, %c0_i32 : i32
    %c1_i32 = arith.constant 1 : i32
    %1 = arith.select %0, %c1_i32, %c2_i32 : i32
    %2 = arith.remsi %arg1, %1 : i32
    %c0_i32_0 = arith.constant 0 : i32
    %3 = arith.cmpi ne, %2, %c0_i32_0 : i32
    %c0_i32_1 = arith.constant 0 : i32
    %4 = arith.cmpi slt, %2, %c0_i32_1 : i32
    %c0_i32_2 = arith.constant 0 : i32
    %5 = arith.cmpi slt, %1, %c0_i32_2 : i32
    %6 = arith.xori %4, %5 : i1
    %7 = arith.andi %6, %3 : i1
    %8 = arith.addi %2, %1 : i32
    %9 = arith.select %7, %8, %2 : i32
    %c0_i32_3 = arith.constant 0 : i32
    %10 = arith.cmpi eq, %arg1, %c0_i32_3 : i32
    %11 = arith.extui %10 : i1 to i32
    %c0_i32_4 = arith.constant 0 : i32
    %12 = arith.cmpi ne, %11, %c0_i32_4 : i32
    scf.if %12 {
      %c40_i32 = arith.constant 40 : i32
      %102 = arith.muli %arg0, %c40_i32 : i32
      %c0_i32_79 = arith.constant 0 : i32
      %103 = arith.addi %102, %c0_i32_79 : i32
      %104 = tpu.assume_multiple %103, 8 : i32
      %c0_i32_80 = arith.constant 0 : i32
      %c0_i32_81 = arith.constant 0 : i32
      %c0_i32_82 = arith.constant 0 : i32
      %105 = tpu.memref_slice %arg2[%104, %c0_i32_82] : memref<80x256xbf16, #tpu.memory_space<any>> -> memref<40x256xbf16, #tpu.memory_space<any>>
      %c0_i32_83 = arith.constant 0 : i32
      %c0_i32_84 = arith.constant 0 : i32
      %106 = tpu.memref_slice %arg6[%c0_i32_80, %c0_i32_83, %c0_i32_84] : memref<2x40x256xbf16, #tpu.memory_space<vmem>> -> memref<1x40x256xbf16, #tpu.memory_space<vmem>>
      %107 = tpu.memref_squeeze %106 : memref<1x40x256xbf16, #tpu.memory_space<vmem>> -> memref<40x256xbf16, #tpu.memory_space<vmem>>
      %108 = tpu.memref_slice %arg7[%c0_i32_81] : memref<2x!tpu.dma_semaphore, #tpu.memory_space<semaphore_mem>> -> memref<1x!tpu.dma_semaphore, #tpu.memory_space<semaphore_mem>>
      %109 = tpu.memref_squeeze %108 : memref<1x!tpu.dma_semaphore, #tpu.memory_space<semaphore_mem>> -> memref<!tpu.dma_semaphore, #tpu.memory_space<semaphore_mem>>
      tpu.enqueue_dma source(%105 : memref<40x256xbf16, #tpu.memory_space<any>>) target(%107 : memref<40x256xbf16, #tpu.memory_space<vmem>>) target_semaphore(%109 : memref<!tpu.dma_semaphore, #tpu.memory_space<semaphore_mem>>)
    } else {
    }
    %c0_i32_5 = arith.constant 0 : i32
    %c0_i32_6 = arith.constant 0 : i32
    %13 = tpu.memref_slice %arg2[%c0_i32_5, %c0_i32_6] : memref<80x256xbf16, #tpu.memory_space<any>> -> memref<40x256xbf16, #tpu.memory_space<any>>
    %c0_i32_7 = arith.constant 0 : i32
    %c0_i32_8 = arith.constant 0 : i32
    %14 = tpu.memref_slice %arg6[%9, %c0_i32_7, %c0_i32_8] : memref<2x40x256xbf16, #tpu.memory_space<vmem>> -> memref<1x40x256xbf16, #tpu.memory_space<vmem>>
    %15 = tpu.memref_squeeze %14 : memref<1x40x256xbf16, #tpu.memory_space<vmem>> -> memref<40x256xbf16, #tpu.memory_space<vmem>>
    %16 = tpu.memref_slice %arg7[%9] : memref<2x!tpu.dma_semaphore, #tpu.memory_space<semaphore_mem>> -> memref<1x!tpu.dma_semaphore, #tpu.memory_space<semaphore_mem>>
    %17 = tpu.memref_squeeze %16 : memref<1x!tpu.dma_semaphore, #tpu.memory_space<semaphore_mem>> -> memref<!tpu.dma_semaphore, #tpu.memory_space<semaphore_mem>>
    tpu.wait_dma2 semaphore(%17 : memref<!tpu.dma_semaphore, #tpu.memory_space<semaphore_mem>>) src(%13 : memref<40x256xbf16, #tpu.memory_space<any>>) dst(%15 : memref<40x256xbf16, #tpu.memory_space<vmem>>)
    %c1_i32_9 = arith.constant 1 : i32
    %18 = arith.addi %arg1, %c1_i32_9 : i32
    %c1_i32_10 = arith.constant 1 : i32
    %19 = arith.cmpi slt, %18, %c1_i32_10 : i32
    %20 = arith.extui %19 : i1 to i32
    %c0_i32_11 = arith.constant 0 : i32
    %21 = arith.cmpi ne, %20, %c0_i32_11 : i32
    scf.if %21 {
      %c1_i32_79 = arith.constant 1 : i32
      %102 = arith.addi %arg1, %c1_i32_79 : i32
      %c1_i32_80 = arith.constant 1 : i32
      %103 = arith.subi %c1_i32_80, %9 : i32
      %c40_i32 = arith.constant 40 : i32
      %104 = arith.muli %arg0, %c40_i32 : i32
      %c2_i32_81 = arith.constant 2 : i32
      %105 = arith.muli %102, %c2_i32_81 : i32
      %c8_i32 = arith.constant 8 : i32
      %106 = arith.muli %105, %c8_i32 : i32
      %107 = arith.addi %104, %106 : i32
      %108 = tpu.assume_multiple %107, 8 : i32
      %c0_i32_82 = arith.constant 0 : i32
      %109 = tpu.memref_slice %arg2[%108, %c0_i32_82] : memref<80x256xbf16, #tpu.memory_space<any>> -> memref<40x256xbf16, #tpu.memory_space<any>>
      %c0_i32_83 = arith.constant 0 : i32
      %c0_i32_84 = arith.constant 0 : i32
      %110 = tpu.memref_slice %arg6[%103, %c0_i32_83, %c0_i32_84] : memref<2x40x256xbf16, #tpu.memory_space<vmem>> -> memref<1x40x256xbf16, #tpu.memory_space<vmem>>
      %111 = tpu.memref_squeeze %110 : memref<1x40x256xbf16, #tpu.memory_space<vmem>> -> memref<40x256xbf16, #tpu.memory_space<vmem>>
      %112 = tpu.memref_slice %arg7[%103] : memref<2x!tpu.dma_semaphore, #tpu.memory_space<semaphore_mem>> -> memref<1x!tpu.dma_semaphore, #tpu.memory_space<semaphore_mem>>
      %113 = tpu.memref_squeeze %112 : memref<1x!tpu.dma_semaphore, #tpu.memory_space<semaphore_mem>> -> memref<!tpu.dma_semaphore, #tpu.memory_space<semaphore_mem>>
      tpu.enqueue_dma source(%109 : memref<40x256xbf16, #tpu.memory_space<any>>) target(%111 : memref<40x256xbf16, #tpu.memory_space<vmem>>) target_semaphore(%113 : memref<!tpu.dma_semaphore, #tpu.memory_space<semaphore_mem>>)
    } else {
    }
    %cst = arith.constant 0.000000e+00 : f32
    %22 = vector.broadcast %cst : f32 to vector<16x256xf32>
    %c0 = arith.constant 0 : index
    %c0_12 = arith.constant 0 : index
    %23 = vector.load %arg4[%c0, %c0_12] : memref<1x256xf32, #tpu.memory_space<vmem>>, vector<1x256xf32>
    %24 = vector.broadcast %23 : vector<1x256xf32> to vector<16x256xf32>
    %25 = arith.addf %22, %24 : vector<16x256xf32>
    %c0_i32_13 = arith.constant 0 : i32
    %c0_i32_14 = arith.constant 0 : i32
    %26 = tpu.memref_slice %arg6[%9, %c0_i32_13, %c0_i32_14] : memref<2x40x256xbf16, #tpu.memory_space<vmem>> -> memref<1x40x256xbf16, #tpu.memory_space<vmem>>
    %27 = tpu.memref_squeeze %26 : memref<1x40x256xbf16, #tpu.memory_space<vmem>> -> memref<40x256xbf16, #tpu.memory_space<vmem>>
    %c0_15 = arith.constant 0 : index
    %c0_16 = arith.constant 0 : index
    %28 = vector.load %27[%c0_15, %c0_16] : memref<40x256xbf16, #tpu.memory_space<vmem>>, vector<16x256xbf16>
    %c0_17 = arith.constant 0 : index
    %c0_18 = arith.constant 0 : index
    %c0_19 = arith.constant 0 : index
    %29 = vector.load %arg3[%c0_17, %c0_18, %c0_19] : memref<9x256x256xbf16, #tpu.memory_space<vmem>>, vector<1x256x256xbf16>
    %30 = vector.shape_cast %29 : vector<1x256x256xbf16> to vector<256x256xbf16>
    %cst_20 = arith.constant dense<0.000000e+00> : vector<16x256xf32>
    %31 = tpu.matmul %28, %30, %cst_20 {dimension_numbers = #tpu.dot_dimension_numbers<[1], [0], [0], [1], [0, 0, 1, 1], [], []>} : vector<16x256xbf16>, vector<256x256xbf16>, vector<16x256xf32> -> vector<16x256xf32>
    %32 = arith.addf %25, %31 : vector<16x256xf32>
    %c0_i32_21 = arith.constant 0 : i32
    %c0_i32_22 = arith.constant 0 : i32
    %33 = tpu.memref_slice %arg6[%9, %c0_i32_21, %c0_i32_22] : memref<2x40x256xbf16, #tpu.memory_space<vmem>> -> memref<1x40x256xbf16, #tpu.memory_space<vmem>>
    %34 = tpu.memref_squeeze %33 : memref<1x40x256xbf16, #tpu.memory_space<vmem>> -> memref<40x256xbf16, #tpu.memory_space<vmem>>
    %c1 = arith.constant 1 : index
    %c0_23 = arith.constant 0 : index
    %35 = vector.load %34[%c1, %c0_23] : memref<40x256xbf16, #tpu.memory_space<vmem>>, vector<16x256xbf16>
    %c1_24 = arith.constant 1 : index
    %c0_25 = arith.constant 0 : index
    %c0_26 = arith.constant 0 : index
    %36 = vector.load %arg3[%c1_24, %c0_25, %c0_26] : memref<9x256x256xbf16, #tpu.memory_space<vmem>>, vector<1x256x256xbf16>
    %37 = vector.shape_cast %36 : vector<1x256x256xbf16> to vector<256x256xbf16>
    %cst_27 = arith.constant dense<0.000000e+00> : vector<16x256xf32>
    %38 = tpu.matmul %35, %37, %cst_27 {dimension_numbers = #tpu.dot_dimension_numbers<[1], [0], [0], [1], [0, 0, 1, 1], [], []>} : vector<16x256xbf16>, vector<256x256xbf16>, vector<16x256xf32> -> vector<16x256xf32>
    %39 = arith.addf %32, %38 : vector<16x256xf32>
    %c0_i32_28 = arith.constant 0 : i32
    %c0_i32_29 = arith.constant 0 : i32
    %40 = tpu.memref_slice %arg6[%9, %c0_i32_28, %c0_i32_29] : memref<2x40x256xbf16, #tpu.memory_space<vmem>> -> memref<1x40x256xbf16, #tpu.memory_space<vmem>>
    %41 = tpu.memref_squeeze %40 : memref<1x40x256xbf16, #tpu.memory_space<vmem>> -> memref<40x256xbf16, #tpu.memory_space<vmem>>
    %c2 = arith.constant 2 : index
    %c0_30 = arith.constant 0 : index
    %42 = vector.load %41[%c2, %c0_30] : memref<40x256xbf16, #tpu.memory_space<vmem>>, vector<16x256xbf16>
    %c2_31 = arith.constant 2 : index
    %c0_32 = arith.constant 0 : index
    %c0_33 = arith.constant 0 : index
    %43 = vector.load %arg3[%c2_31, %c0_32, %c0_33] : memref<9x256x256xbf16, #tpu.memory_space<vmem>>, vector<1x256x256xbf16>
    %44 = vector.shape_cast %43 : vector<1x256x256xbf16> to vector<256x256xbf16>
    %cst_34 = arith.constant dense<0.000000e+00> : vector<16x256xf32>
    %45 = tpu.matmul %42, %44, %cst_34 {dimension_numbers = #tpu.dot_dimension_numbers<[1], [0], [0], [1], [0, 0, 1, 1], [], []>} : vector<16x256xbf16>, vector<256x256xbf16>, vector<16x256xf32> -> vector<16x256xf32>
    %46 = arith.addf %39, %45 : vector<16x256xf32>
    %c0_i32_35 = arith.constant 0 : i32
    %c0_i32_36 = arith.constant 0 : i32
    %47 = tpu.memref_slice %arg6[%9, %c0_i32_35, %c0_i32_36] : memref<2x40x256xbf16, #tpu.memory_space<vmem>> -> memref<1x40x256xbf16, #tpu.memory_space<vmem>>
    %48 = tpu.memref_squeeze %47 : memref<1x40x256xbf16, #tpu.memory_space<vmem>> -> memref<40x256xbf16, #tpu.memory_space<vmem>>
    %c8 = arith.constant 8 : index
    %c0_37 = arith.constant 0 : index
    %49 = vector.load %48[%c8, %c0_37] : memref<40x256xbf16, #tpu.memory_space<vmem>>, vector<16x256xbf16>
    %c3 = arith.constant 3 : index
    %c0_38 = arith.constant 0 : index
    %c0_39 = arith.constant 0 : index
    %50 = vector.load %arg3[%c3, %c0_38, %c0_39] : memref<9x256x256xbf16, #tpu.memory_space<vmem>>, vector<1x256x256xbf16>
    %51 = vector.shape_cast %50 : vector<1x256x256xbf16> to vector<256x256xbf16>
    %cst_40 = arith.constant dense<0.000000e+00> : vector<16x256xf32>
    %52 = tpu.matmul %49, %51, %cst_40 {dimension_numbers = #tpu.dot_dimension_numbers<[1], [0], [0], [1], [0, 0, 1, 1], [], []>} : vector<16x256xbf16>, vector<256x256xbf16>, vector<16x256xf32> -> vector<16x256xf32>
    %53 = arith.addf %46, %52 : vector<16x256xf32>
    %c0_i32_41 = arith.constant 0 : i32
    %c0_i32_42 = arith.constant 0 : i32
    %54 = tpu.memref_slice %arg6[%9, %c0_i32_41, %c0_i32_42] : memref<2x40x256xbf16, #tpu.memory_space<vmem>> -> memref<1x40x256xbf16, #tpu.memory_space<vmem>>
    %55 = tpu.memref_squeeze %54 : memref<1x40x256xbf16, #tpu.memory_space<vmem>> -> memref<40x256xbf16, #tpu.memory_space<vmem>>
    %c9 = arith.constant 9 : index
    %c0_43 = arith.constant 0 : index
    %56 = vector.load %55[%c9, %c0_43] : memref<40x256xbf16, #tpu.memory_space<vmem>>, vector<16x256xbf16>
    %c4 = arith.constant 4 : index
    %c0_44 = arith.constant 0 : index
    %c0_45 = arith.constant 0 : index
    %57 = vector.load %arg3[%c4, %c0_44, %c0_45] : memref<9x256x256xbf16, #tpu.memory_space<vmem>>, vector<1x256x256xbf16>
    %58 = vector.shape_cast %57 : vector<1x256x256xbf16> to vector<256x256xbf16>
    %cst_46 = arith.constant dense<0.000000e+00> : vector<16x256xf32>
    %59 = tpu.matmul %56, %58, %cst_46 {dimension_numbers = #tpu.dot_dimension_numbers<[1], [0], [0], [1], [0, 0, 1, 1], [], []>} : vector<16x256xbf16>, vector<256x256xbf16>, vector<16x256xf32> -> vector<16x256xf32>
    %60 = arith.addf %53, %59 : vector<16x256xf32>
    %c0_i32_47 = arith.constant 0 : i32
    %c0_i32_48 = arith.constant 0 : i32
    %61 = tpu.memref_slice %arg6[%9, %c0_i32_47, %c0_i32_48] : memref<2x40x256xbf16, #tpu.memory_space<vmem>> -> memref<1x40x256xbf16, #tpu.memory_space<vmem>>
    %62 = tpu.memref_squeeze %61 : memref<1x40x256xbf16, #tpu.memory_space<vmem>> -> memref<40x256xbf16, #tpu.memory_space<vmem>>
    %c10 = arith.constant 10 : index
    %c0_49 = arith.constant 0 : index
    %63 = vector.load %62[%c10, %c0_49] : memref<40x256xbf16, #tpu.memory_space<vmem>>, vector<16x256xbf16>
    %c5 = arith.constant 5 : index
    %c0_50 = arith.constant 0 : index
    %c0_51 = arith.constant 0 : index
    %64 = vector.load %arg3[%c5, %c0_50, %c0_51] : memref<9x256x256xbf16, #tpu.memory_space<vmem>>, vector<1x256x256xbf16>
    %65 = vector.shape_cast %64 : vector<1x256x256xbf16> to vector<256x256xbf16>
    %cst_52 = arith.constant dense<0.000000e+00> : vector<16x256xf32>
    %66 = tpu.matmul %63, %65, %cst_52 {dimension_numbers = #tpu.dot_dimension_numbers<[1], [0], [0], [1], [0, 0, 1, 1], [], []>} : vector<16x256xbf16>, vector<256x256xbf16>, vector<16x256xf32> -> vector<16x256xf32>
    %67 = arith.addf %60, %66 : vector<16x256xf32>
    %c0_i32_53 = arith.constant 0 : i32
    %c0_i32_54 = arith.constant 0 : i32
    %68 = tpu.memref_slice %arg6[%9, %c0_i32_53, %c0_i32_54] : memref<2x40x256xbf16, #tpu.memory_space<vmem>> -> memref<1x40x256xbf16, #tpu.memory_space<vmem>>
    %69 = tpu.memref_squeeze %68 : memref<1x40x256xbf16, #tpu.memory_space<vmem>> -> memref<40x256xbf16, #tpu.memory_space<vmem>>
    %c16 = arith.constant 16 : index
    %c0_55 = arith.constant 0 : index
    %70 = vector.load %69[%c16, %c0_55] : memref<40x256xbf16, #tpu.memory_space<vmem>>, vector<16x256xbf16>
    %c6 = arith.constant 6 : index
    %c0_56 = arith.constant 0 : index
    %c0_57 = arith.constant 0 : index
    %71 = vector.load %arg3[%c6, %c0_56, %c0_57] : memref<9x256x256xbf16, #tpu.memory_space<vmem>>, vector<1x256x256xbf16>
    %72 = vector.shape_cast %71 : vector<1x256x256xbf16> to vector<256x256xbf16>
    %cst_58 = arith.constant dense<0.000000e+00> : vector<16x256xf32>
    %73 = tpu.matmul %70, %72, %cst_58 {dimension_numbers = #tpu.dot_dimension_numbers<[1], [0], [0], [1], [0, 0, 1, 1], [], []>} : vector<16x256xbf16>, vector<256x256xbf16>, vector<16x256xf32> -> vector<16x256xf32>
    %74 = arith.addf %67, %73 : vector<16x256xf32>
    %c0_i32_59 = arith.constant 0 : i32
    %c0_i32_60 = arith.constant 0 : i32
    %75 = tpu.memref_slice %arg6[%9, %c0_i32_59, %c0_i32_60] : memref<2x40x256xbf16, #tpu.memory_space<vmem>> -> memref<1x40x256xbf16, #tpu.memory_space<vmem>>
    %76 = tpu.memref_squeeze %75 : memref<1x40x256xbf16, #tpu.memory_space<vmem>> -> memref<40x256xbf16, #tpu.memory_space<vmem>>
    %c17 = arith.constant 17 : index
    %c0_61 = arith.constant 0 : index
    %77 = vector.load %76[%c17, %c0_61] : memref<40x256xbf16, #tpu.memory_space<vmem>>, vector<16x256xbf16>
    %c7 = arith.constant 7 : index
    %c0_62 = arith.constant 0 : index
    %c0_63 = arith.constant 0 : index
    %78 = vector.load %arg3[%c7, %c0_62, %c0_63] : memref<9x256x256xbf16, #tpu.memory_space<vmem>>, vector<1x256x256xbf16>
    %79 = vector.shape_cast %78 : vector<1x256x256xbf16> to vector<256x256xbf16>
    %cst_64 = arith.constant dense<0.000000e+00> : vector<16x256xf32>
    %80 = tpu.matmul %77, %79, %cst_64 {dimension_numbers = #tpu.dot_dimension_numbers<[1], [0], [0], [1], [0, 0, 1, 1], [], []>} : vector<16x256xbf16>, vector<256x256xbf16>, vector<16x256xf32> -> vector<16x256xf32>
    %81 = arith.addf %74, %80 : vector<16x256xf32>
    %c0_i32_65 = arith.constant 0 : i32
    %c0_i32_66 = arith.constant 0 : i32
    %82 = tpu.memref_slice %arg6[%9, %c0_i32_65, %c0_i32_66] : memref<2x40x256xbf16, #tpu.memory_space<vmem>> -> memref<1x40x256xbf16, #tpu.memory_space<vmem>>
    %83 = tpu.memref_squeeze %82 : memref<1x40x256xbf16, #tpu.memory_space<vmem>> -> memref<40x256xbf16, #tpu.memory_space<vmem>>
    %c18 = arith.constant 18 : index
    %c0_67 = arith.constant 0 : index
    %84 = vector.load %83[%c18, %c0_67] : memref<40x256xbf16, #tpu.memory_space<vmem>>, vector<16x256xbf16>
    %c8_68 = arith.constant 8 : index
    %c0_69 = arith.constant 0 : index
    %c0_70 = arith.constant 0 : index
    %85 = vector.load %arg3[%c8_68, %c0_69, %c0_70] : memref<9x256x256xbf16, #tpu.memory_space<vmem>>, vector<1x256x256xbf16>
    %86 = vector.shape_cast %85 : vector<1x256x256xbf16> to vector<256x256xbf16>
    %cst_71 = arith.constant dense<0.000000e+00> : vector<16x256xf32>
    %87 = tpu.matmul %84, %86, %cst_71 {dimension_numbers = #tpu.dot_dimension_numbers<[1], [0], [0], [1], [0, 0, 1, 1], [], []>} : vector<16x256xbf16>, vector<256x256xbf16>, vector<16x256xf32> -> vector<16x256xf32>
    %88 = arith.addf %81, %87 : vector<16x256xf32>
    %cst_72 = arith.constant 0.000000e+00 : f32
    %89 = vector.broadcast %cst_72 : f32 to vector<16x256xf32>
    %90 = arith.cmpf ogt, %88, %89 : vector<16x256xf32>
    %cst_73 = arith.constant 0.000000e+00 : f32
    %91 = vector.broadcast %cst_73 : f32 to vector<16x256xf32>
    %92 = arith.minimumf %88, %91 : vector<16x256xf32>
    %93 = math.exp %92 : vector<16x256xf32>
    %cst_74 = arith.constant 1.000000e+00 : f32
    %94 = vector.broadcast %cst_74 : f32 to vector<16x256xf32>
    %95 = arith.subf %93, %94 : vector<16x256xf32>
    %96 = arith.select %90, %88, %95 : vector<16x256xi1>, vector<16x256xf32>
    %97 = vector.shape_cast %96 : vector<16x256xf32> to vector<2x8x256xf32>
    %98 = arith.truncf %97 : vector<2x8x256xf32> to vector<2x8x256xbf16>
    %c0_75 = arith.constant 0 : index
    %c0_76 = arith.constant 0 : index
    %c0_77 = arith.constant 0 : index
    %c0_78 = arith.constant 0 : index
    %99 = vector.load %arg5[%c0_75, %c0_76, %c0_77, %c0_78] : memref<1x2x8x256xbf16, #tpu.memory_space<vmem>>, vector<1x2x8x256xbf16>
    %100 = vector.shape_cast %99 : vector<1x2x8x256xbf16> to vector<2x8x256xbf16>
    %101 = vector.shape_cast %98 : vector<2x8x256xbf16> to vector<1x2x8x256xbf16>
    tpu.vector_store %arg5[%c0_75, %c0_76, %c0_77, %c0_78], %101 {strides = array<i32>} : memref<1x2x8x256xbf16, #tpu.memory_space<vmem>>, vector<1x2x8x256xbf16>,
    return
  }
  func.func @transform_1(%arg0: i32, %arg1: i32) -> (i32, i32, i32) {
    %c0_i32 = arith.constant 0 : i32
    %c0_i32_0 = arith.constant 0 : i32
    %c0_i32_1 = arith.constant 0 : i32
    %c0_i32_2 = arith.constant 0 : i32
    return %c0_i32, %c0_i32_0, %c0_i32_1 : i32, i32, i32
  }
  func.func @transform_2(%arg0: i32, %arg1: i32) -> (i32, i32) {
    %c0_i32 = arith.constant 0 : i32
    %c0_i32_0 = arith.constant 0 : i32
    %c0_i32_1 = arith.constant 0 : i32
    return %c0_i32, %c0_i32_0 : i32, i32
  }
  func.func @transform_3(%arg0: i32, %arg1: i32) -> (i32, i32, i32, i32) {
    %c0_i32 = arith.constant 0 : i32
    %c0_i32_0 = arith.constant 0 : i32
    %c0_i32_1 = arith.constant 0 : i32
    return %arg0, %arg1, %c0_i32, %c0_i32_0 : i32, i32, i32, i32
  }
}

</mosaic_0001>

<llo_original>
// kernel: tpu_custom_call.1
$region0: #{tpu_custom_call.1}
  #allocation0 [shape = 'u32[]', space=smem, size = 0x4, offset = 0x4, fixed_abs, tag = 'smem constant byte address 0x4 - core index']
  #allocation1 [shape = 'u32[144,128]{1,0:T(1,128)}', space=vmem, size = 0x12000, scoped, tag = 'internal scratch']
  #allocation2 [shape = 'bf16[2,40,256]{2,1,0:T(8,128)(2,1)}', space=vmem, size = 0xa000, scoped, tag = 'scratch operand']
  #allocation3 [shape = 's32[2]{0}', space=sflag, size = 0x8, scoped, tag = 'scratch operand']
  #allocation10 [shape = 's32[]', space=sflag, size = 0x4, offset = 0, fixed_abs, tag = 'sflag constant byte address 0x0 - dummy sync flag']
  #allocation11 [shape = 's32[]', space=sflag, size = 0x4, offset = 0, fixed_abs, tag = 'sflag constant byte address 0x0 - dummy sync flag']
  #allocation12 [shape = 'u32[]', space=smem, size = 0x4, offset = 0x44, fixed_abs, tag = 'smem constant byte address 0x44 - assertion arg 0']
  #allocation13 [shape = 'u32[]', space=smem, size = 0x4, offset = 0x48, fixed_abs, tag = 'smem constant byte address 0x48 - assertion arg 1']
  #allocation14 [shape = 's32[]', space=sflag, size = 0x4, offset = 0, fixed_abs, tag = 'sflag constant byte address 0x0 - dummy sync flag']
  #allocation15 [shape = 's32[]', space=sflag, size = 0x4, offset = 0, fixed_abs, tag = 'sflag constant byte address 0x0 - dummy sync flag']
  %s0 = inlined_call_operand.hbm [shape: bf16[80,256], index: 0, kind: input, shape index: {}]
  %s1 = inlined_call_operand.hbm [shape: bf16[9,256,256], index: 1, kind: input, shape index: {}]
  %s2 = inlined_call_operand.hbm [shape: f32[1,256], index: 2, kind: input, shape index: {}]
  %s3 = inlined_call_operand.hbm [shape: bf16[2,2,8,256], index: 3, kind: output, shape index: {}]
  %s4 = sld [smem:[#allocation0]]
  $region65: #{tpu_custom_call.1} parent=0
    _
  %s6 = ssub.s32 1, %s4
  %s7 = scalar_select 0, %s6, %s4
  $region1: #{tpu_custom_call.1} parent=0
    #allocation4 [shape = 'u8[1179648]{0}', space=vmem, size = 0x120000, scoped, tag = 'input window, operand 1, single buffered']
    #allocation5 [shape = 's32[2]{0}', space=sflag, size = 0x8, scoped, tag = 'scoped memory for tpu_custom_call.1']
    #allocation6 [shape = 's32[2]{0}', space=sflag, size = 0x8, scoped, tag = 'scoped memory for tpu_custom_call.1']
    #allocation7 [shape = 'u8[1024]{0}', space=vmem, size = 0x400, scoped, tag = 'input window, operand 2, single buffered']
    #allocation8 [shape = 's32[1]{0}', space=sflag, size = 0x4, scoped, tag = 'scoped memory for tpu_custom_call.1']
    #allocation9 [shape = 'u8[16384]{0}', space=vmem, size = 0x4000, scoped, tag = 'output window, operand 0']
    %8 = vsyncpa [#allocation5], 0
    %9 = vsyncpa [#allocation8], 0
    %10 = vsyncpa [#allocation6], 0
    %s11 = scalar_lea.sflag [#allocation6], 1
    %12 = vsyncpa %s11, 0
    loop: start=0, step=1, limit=4
    $region2: #{tpu_custom_call.1} parent=1 // loop_pre_header
      _
    $region3: #{tpu_custom_call.1} parent=1 // loop_header
      %s14 = sphi 0, %s18
      %p15 = scmp.ge.s32.totalorder %s14, 4
      %s21 = sphi 0, %s33
      %s22 = sphi 0, %s29
      %s23 = sphi 0, %s21
      %s24 = sphi 0, %s22
      %s25 = sphi 0, %s23
      %s26 = sphi 0, %s24
      %s34 = sphi 0, %s34
      %s36 = sphi 0, %s34
      %s37 = sphi 0, %s36
      %s51 = sphi 0, %s37
      %s55 = sphi 0, %s55
      %s57 = sphi 0, %s55
      %s58 = sphi 0, %s57
      %s72 = sphi 0, %s58
      %s80 = sphi 0, %s82
      %s83 = sphi 0, %s80
      %s84 = sphi 0, %s83
      %s100 = sphi 0, %s84
    $region4: #{tpu_custom_call.1} parent=1 // loop_header_branch
      %17 = sbr.rel (%p15) target = $region8
    $region5: #{tpu_custom_call.1} parent=1 // loop_body
      %s19 = ssub.s32 %s14, 1
      %s20 = ssub.s32 %s14, 2
      %s27 = sadd.s32 1, %s22
      %p28 = scmp.ge.s32.totalorder %s27, 1
      %s29 = scalar_select %p28, 0, %s27
      %s30 = sadd.s32 1, %s21
      %s31 = scalar_select %p28, %s30, %s21
      %p32 = scmp.ge.s32.totalorder %s31, 2
      %s33 = scalar_select %p32, 0, %s31
      %s35 = sadd.s32 %s34, 1
      %p38 = scmp.eq.s32.totalorder %s14, 1
      %p39 = scmp.ne.s32.totalorder %s34, %s36
      %p40 = scmp.eq.s32.totalorder %s14, 0
      %p41 = por %p39, %p40
      %p42 = scmp.ne.s32.totalorder %s34, %s36
      %p43 = scmp.eq.s32.totalorder %s19, 1
      %p44 = por %p42, %p43
      %p45 = scmp.ne.s32.totalorder %s36, %s37
      %p46 = scmp.eq.s32.totalorder %s19, 0
      %p47 = por %p45, %p46
      %p48 = scmp.ne.s32.totalorder %s36, %s37
      %p49 = scmp.eq.s32.totalorder %s20, 1
      %p50 = por %p48, %p49
      %p52 = scmp.ne.s32.totalorder %s37, %s51
      %p53 = scmp.eq.s32.totalorder %s20, 0
      %p54 = por %p52, %p53
      %s56 = sadd.s32 %s55, 1
      %p59 = scmp.eq.s32.totalorder %s14, 1
      %p60 = scmp.ne.s32.totalorder %s55, %s57
      %p61 = scmp.eq.s32.totalorder %s14, 0
      %p62 = por %p60, %p61
      %p63 = scmp.ne.s32.totalorder %s55, %s57
      %p64 = scmp.eq.s32.totalorder %s19, 1
      %p65 = por %p63, %p64
      %p66 = scmp.ne.s32.totalorder %s57, %s58
      %p67 = scmp.eq.s32.totalorder %s19, 0
      %p68 = por %p66, %p67
      %p69 = scmp.ne.s32.totalorder %s57, %s58
      %p70 = scmp.eq.s32.totalorder %s20, 1
      %p71 = por %p69, %p70
      %p73 = scmp.ne.s32.totalorder %s58, %s72
      %p74 = scmp.eq.s32.totalorder %s20, 0
      %p75 = por %p73, %p74
      %s76 = ssub.s32 %s21, %s33
      %s77 = ssub.s32 %s22, %s29
      %s78 = sor.u32 %s76, %s77
      %p79 = scmp.eq.s32.totalorder %s78, 0
      %s81 = sadd.s32 %s80, 1
      %s82 = scalar_select %p79, %s80, %s81
      %p85 = pneg %p79
      %p86 = scmp.eq.s32.totalorder %s14, 1
      %p87 = por %p85, %p86
      %p88 = scmp.ne.s32.totalorder %s80, %s83
      %p89 = scmp.eq.s32.totalorder %s14, 0
      %p90 = por %p88, %p89
      %p91 = scmp.ne.s32.totalorder %s80, %s83
      %p92 = scmp.eq.s32.totalorder %s19, 1
      %p93 = por %p91, %p92
      %p94 = scmp.ne.s32.totalorder %s83, %s84
      %p95 = scmp.eq.s32.totalorder %s19, 0
      %p96 = por %p94, %p95
      %p97 = scmp.ne.s32.totalorder %s83, %s84
      %p98 = scmp.eq.s32.totalorder %s20, 1
      %p99 = por %p97, %p98
      %p101 = scmp.ne.s32.totalorder %s84, %s100
      %p102 = scmp.eq.s32.totalorder %s20, 0
      %p103 = por %p101, %p102
      %p104 = scmp.le.s32.totalorder 1, %s14
      %p105 = scmp.lt.s32.totalorder %s14, 3
      %p106 = pnand %p104, %p105
      %p107 = pneg %p106
      // Predicated region
      $region9: #{tpu_custom_call.1} parent=5 // pred_check
        _
      $region10: #{tpu_custom_call.1} parent=5 // pred_check_branch
        %109 = sbr.rel (%p106) target = $region12
      $region11: #{tpu_custom_call.1} parent=5 // pred_region
        %s110 = ssub.s32 %s14, 1
        // Predicated region
        $region13: #{tpu_custom_call.1} parent=11 // pred_check
          %p111 = pneg %p47
        $region14: #{tpu_custom_call.1} parent=11 // pred_check_branch
          %113 = sbr.rel (%p111) target = $region16
        $region15: #{tpu_custom_call.1} parent=11 // pred_region
          %s115 = ssub.s32 36864, 36864
          %116 = vsyncadd [#allocation5], %s115
          %s117 = sshll.u32 [#allocation4], 4
          %s118 = int_to_ptr.vmem [resolvable:$true] %s117
          %123 = dma.hbm_to_vmem [thread:$0]  %s1, 36864, %s118, [#allocation5], 128, 128, 8
        $region16: #{tpu_custom_call.1} parent=11 // pred_fallthru
          _
        // Predicated region
        $region17: #{tpu_custom_call.1} parent=11 // pred_check
          %p124 = pneg %p68
        $region18: #{tpu_custom_call.1} parent=11 // pred_check_branch
          %126 = sbr.rel (%p124) target = $region20
        $region19: #{tpu_custom_call.1} parent=11 // pred_region
          %s128 = ssub.s32 32, 32
          %129 = vsyncadd [#allocation8], %s128
          %s131 = sshll.u32 [#allocation7], 4
          %s132 = int_to_ptr.vmem [resolvable:$true] %s131
          %134 = dma.hbm_to_vmem [thread:$0]  %s2, 32, %s132, [#allocation8]
        $region20: #{tpu_custom_call.1} parent=11 // pred_fallthru
          _
      $region12: #{tpu_custom_call.1} parent=5 // pred_fallthru
        _
      %p135 = scmp.lt.s32.totalorder %s14, 2
      // Predicated region
      $region21: #{tpu_custom_call.1} parent=5 // pred_check
        %p136 = pneg %p135
      $region22: #{tpu_custom_call.1} parent=5 // pred_check_branch
        %138 = sbr.rel (%p136) target = $region24
      $region23: #{tpu_custom_call.1} parent=5 // pred_region
        _
      $region24: #{tpu_custom_call.1} parent=5 // pred_fallthru
        _
      %p139 = scmp.le.s32.totalorder 1, %s14
      %p140 = scmp.lt.s32.totalorder %s14, 3
      %p141 = pnand %p139, %p140
      %p142 = pneg %p141
      // Predicated region
      $region25: #{tpu_custom_call.1} parent=5 // pred_check
        _
      $region26: #{tpu_custom_call.1} parent=5 // pred_check_branch
        %144 = sbr.rel (%p141) target = $region28
      $region27: #{tpu_custom_call.1} parent=5 // pred_region
        %s145 = ssub.s32 %s14, 1
        // Predicated region
        $region29: #{tpu_custom_call.1} parent=27 // pred_check
          %p146 = pneg %p47
        $region30: #{tpu_custom_call.1} parent=27 // pred_check_branch
          %148 = sbr.rel (%p146) target = $region32
        $region31: #{tpu_custom_call.1} parent=27 // pred_region
          %149 = dma.done [#allocation5], 36864
        $region32: #{tpu_custom_call.1} parent=27 // pred_fallthru
          _
        // Predicated region
        $region33: #{tpu_custom_call.1} parent=27 // pred_check
          %p150 = pneg %p68
        $region34: #{tpu_custom_call.1} parent=27 // pred_check_branch
          %152 = sbr.rel (%p150) target = $region36
        $region35: #{tpu_custom_call.1} parent=27 // pred_region
          %153 = dma.done [#allocation8], 32
        $region36: #{tpu_custom_call.1} parent=27 // pred_fallthru
          _
        %p154 = pneg %p47
        %p155 = pneg %p44
        %p156 = pneg %p68
        %p157 = pneg %p65
        %p158 = pneg %p96
        %p159 = pneg %p93
        %s160 = sand.u32 %s83, 1
        %s161 = scalar_lea.sflag [#allocation6], %s160
        %s162 = sand.u32 %s83, 1
        %s163 = smul.addr %s162, 16
        %s164 = scalar_lea.vmem [#allocation9], %s163
        %s165 = smul.u32 2, %s24
        %p166 = scmp.lt.s32.totalorder %s24, 0
        %s167 = ssub.s32 0, %s24
        %s168 = scalar_select %p166, %s167, %s24
        %s169 = sand.u32 %s168, 1
        %s170 = ssub.s32 0, %s169
        %s171 = scalar_select %p166, %s170, %s169
        %p172 = scmp.ne.s32.totalorder %s171, 0
        %p173 = scmp.lt.s32.totalorder %s171, 0
        %p174 = pnand %p173, %p172
        %p175 = pneg %p174
        %s176 = sadd.s32 %s171, 2
        %s177 = scalar_select %p175, %s176, %s171
        %p178 = scmp.eq.s32.totalorder %s24, 0
        // Predicated region
        $region37: #{tpu_custom_call.1} parent=27 // pred_check
          %p179 = pneg %p178
        $region38: #{tpu_custom_call.1} parent=27 // pred_check_branch
          %181 = sbr.rel (%p179) target = $region40
        $region39: #{tpu_custom_call.1} parent=27 // pred_region
          %s182 = smul.u32 %s23, 40
          %s183 = sshra.s32 %s182, 3
          %s184 = sand.u32 %s182, 7
          %s185 = smul.u32 %s183, 2
          %s186 = smul.addr %s185, 64
          %s187 = scalar_lea.hbm %s0, %s186
          // Predicated region
          $region41: #{tpu_custom_call.1} parent=39 // pred_check
            _
          $region42: #{tpu_custom_call.1} parent=39 // pred_check_branch
            %189 = sbr.rel target = $region44
          $region43: #{tpu_custom_call.1} parent=39 // pred_region
            %190 = sst [smem:[#allocation12]] [#allocation11]
            %191 = sst [smem:[#allocation13]] [#allocation10]
          $region44: #{tpu_custom_call.1} parent=39 // pred_fallthru
            _
          %193 = shalt.err (0)
          %s195 = sshll.u32 [#allocation2], 4
          %s196 = int_to_ptr.vmem [resolvable:$true] %s195
          %198 = dma.hbm_to_vmem [thread:$0]  %s187, 640, %s196, [#allocation3]
        $region40: #{tpu_custom_call.1} parent=27 // pred_fallthru
          _
        %s199 = smul.u32 %s177, 10
        %s200 = smul.addr %s199, 4
        %s201 = scalar_lea.vmem [#allocation2], %s200
        %s202 = scalar_lea.sflag [#allocation3], %s177
        %s203 = smul.u32 4, 5
        %s204 = smul.u32 %s203, 2
        %s205 = sshll.u32 %s204, 4
        %206 = dma.done %s202, %s205
        %s207 = sadd.s32 %s24, 1
        %p208 = scmp.lt.s32.totalorder %s207, 1
        // Predicated region
        $region45: #{tpu_custom_call.1} parent=27 // pred_check
          %p209 = pneg %p208
        $region46: #{tpu_custom_call.1} parent=27 // pred_check_branch
          %211 = sbr.rel (%p209) target = $region48
        $region47: #{tpu_custom_call.1} parent=27 // pred_region
          %s212 = ssub.s32 1, %s177
          %s213 = smul.u32 %s23, 40
          %s214 = smul.u32 %s207, 16
          %s215 = sadd.s32 %s213, %s214
          %s216 = sshra.s32 %s215, 3
          %s217 = sand.u32 %s215, 7
          %s218 = smul.u32 %s216, 2
          %s219 = smul.addr %s218, 64
          %s220 = scalar_lea.hbm %s0, %s219
          %s221 = smul.u32 %s212, 10
          %s222 = smul.addr %s221, 4
          %s223 = scalar_lea.vmem [#allocation2], %s222
          %s224 = scalar_lea.sflag [#allocation3], %s212
          // Predicated region
          $region49: #{tpu_custom_call.1} parent=47 // pred_check
            _
          $region50: #{tpu_custom_call.1} parent=47 // pred_check_branch
            %226 = sbr.rel target = $region52
          $region51: #{tpu_custom_call.1} parent=47 // pred_region
            %227 = sst [smem:[#allocation12]] [#allocation15]
            %228 = sst [smem:[#allocation13]] [#allocation14]
          $region52: #{tpu_custom_call.1} parent=47 // pred_fallthru
            _
          %230 = shalt.err (0)
          %s232 = sshll.u32 %s223, 4
          %s233 = int_to_ptr.vmem [resolvable:$true] %s232
          %235 = dma.hbm_to_vmem [thread:$0]  %s220, 640, %s233, %s224
        $region48: #{tpu_custom_call.1} parent=27 // pred_fallthru
          _
        %v236 = vld [vmem:[#allocation7] sm:$0x3]
        %v238 = vlaneseq
        %v239 = vshrl.u32 %v238, 7
        %v240 = vsub.s32 0, %v239
        %v241 = vrot.slane %v236, %v240
        %v242 = vlaneseq
        %v243 = vshrl.u32 %v242, 7
        %v244 = vsub.s32 1, %v243
        %v245 = vrot.slane %v236, %v244
        %v248 = vadd.f32 %v241, 0.0
        %v249 = vadd.f32 %v245, 0.0
        %v250 = vld [vmem:[%s201] sm:$0xff]
        %v251 = vld [vmem:[%s201 + $0x8] sm:$0xff]
        %v252 = vld [vmem:[#allocation4] sm:$0xff]
        %v253 = vld [vmem:[#allocation4 + $0x8] sm:$0xff]
        %v254 = vld [vmem:[#allocation4 + $0x10] sm:$0xff]
        %v255 = vld [vmem:[#allocation4 + $0x18] sm:$0xff]
        %v256 = vld [vmem:[#allocation4 + $0x20] sm:$0xff]
        %v257 = vld [vmem:[#allocation4 + $0x28] sm:$0xff]
        %v258 = vld [vmem:[#allocation4 + $0x30] sm:$0xff]
        %v259 = vld [vmem:[#allocation4 + $0x38] sm:$0xff]
        %v260 = vld [vmem:[#allocation4 + $0x40] sm:$0xff]
        %v261 = vld [vmem:[#allocation4 + $0x48] sm:$0xff]
        %v262 = vld [vmem:[#allocation4 + $0x50] sm:$0xff]
        %v263 = vld [vmem:[#allocation4 + $0x58] sm:$0xff]
        %v264 = vld [vmem:[#allocation4 + $0x60] sm:$0xff]
        %v265 = vld [vmem:[#allocation4 + $0x68] sm:$0xff]
        %v266 = vld [vmem:[#allocation4 + $0x70] sm:$0xff]
        %v267 = vld [vmem:[#allocation4 + $0x78] sm:$0xff]
        %v268 = vld [vmem:[#allocation4 + $0x80] sm:$0xff]
        %v269 = vld [vmem:[#allocation4 + $0x88] sm:$0xff]
        %v270 = vld [vmem:[#allocation4 + $0x90] sm:$0xff]
        %v271 = vld [vmem:[#allocation4 + $0x98] sm:$0xff]
        %v272 = vld [vmem:[#allocation4 + $0xa0] sm:$0xff]
        %v273 = vld [vmem:[#allocation4 + $0xa8] sm:$0xff]
        %v274 = vld [vmem:[#allocation4 + $0xb0] sm:$0xff]
        %v275 = vld [vmem:[#allocation4 + $0xb8] sm:$0xff]
        %v276 = vld [vmem:[#allocation4 + $0xc0] sm:$0xff]
        %v277 = vld [vmem:[#allocation4 + $0xc8] sm:$0xff]
        %v278 = vld [vmem:[#allocation4 + $0xd0] sm:$0xff]
        %v279 = vld [vmem:[#allocation4 + $0xd8] sm:$0xff]
        %v280 = vld [vmem:[#allocation4 + $0xe0] sm:$0xff]
        %v281 = vld [vmem:[#allocation4 + $0xe8] sm:$0xff]
        %v282 = vld [vmem:[#allocation4 + $0xf0] sm:$0xff]
        %v283 = vld [vmem:[#allocation4 + $0xf8] sm:$0xff]
        %v286 = vunpack.c.l.b16 %v250
        %v287 = vunpack.c.h.b16 %v250
        %v288 = vunpack.c.l.b16 %v251
        %v289 = vunpack.c.h.b16 %v251
        %v290 = vpack.c.b16 %v288, %v286
        %v291 = vpack.c.b16 %v289, %v287
        %v326 = vunpack.c.l.b16 %v252
        %v327 = vunpack.c.h.b16 %v252
        %v328 = vunpack.c.l.b16 %v253
        %v329 = vunpack.c.h.b16 %v253
        %v330 = vunpack.c.l.b16 %v254
        %v331 = vunpack.c.h.b16 %v254
        %v332 = vunpack.c.l.b16 %v255
        %v333 = vunpack.c.h.b16 %v255
        %v334 = vunpack.c.l.b16 %v256
        %v335 = vunpack.c.h.b16 %v256
        %v336 = vunpack.c.l.b16 %v257
        %v337 = vunpack.c.h.b16 %v257
        %v338 = vunpack.c.l.b16 %v258
        %v339 = vunpack.c.h.b16 %v258
        %v340 = vunpack.c.l.b16 %v259
        %v341 = vunpack.c.h.b16 %v259
        %v342 = vunpack.c.l.b16 %v260
        %v343 = vunpack.c.h.b16 %v260
        %v344 = vunpack.c.l.b16 %v261
        %v345 = vunpack.c.h.b16 %v261
        %v346 = vunpack.c.l.b16 %v262
        %v347 = vunpack.c.h.b16 %v262
        %v348 = vunpack.c.l.b16 %v263
        %v349 = vunpack.c.h.b16 %v263
        %v350 = vunpack.c.l.b16 %v264
        %v351 = vunpack.c.h.b16 %v264
        %v352 = vunpack.c.l.b16 %v265
        %v353 = vunpack.c.h.b16 %v265
        %v354 = vunpack.c.l.b16 %v266
        %v355 = vunpack.c.h.b16 %v266
        %v356 = vunpack.c.l.b16 %v267
        %v357 = vunpack.c.h.b16 %v267
        %v358 = vunpack.c.l.b16 %v268
        %v359 = vunpack.c.h.b16 %v268
        %v360 = vunpack.c.l.b16 %v269
        %v361 = vunpack.c.h.b16 %v269
        %v362 = vunpack.c.l.b16 %v270
        %v363 = vunpack.c.h.b16 %v270
        %v364 = vunpack.c.l.b16 %v271
        %v365 = vunpack.c.h.b16 %v271
        %v366 = vunpack.c.l.b16 %v272
        %v367 = vunpack.c.h.b16 %v272
        %v368 = vunpack.c.l.b16 %v273
        %v369 = vunpack.c.h.b16 %v273
        %v370 = vunpack.c.l.b16 %v274
        %v371 = vunpack.c.h.b16 %v274
        %v372 = vunpack.c.l.b16 %v275
        %v373 = vunpack.c.h.b16 %v275
        %v374 = vunpack.c.l.b16 %v276
        %v375 = vunpack.c.h.b16 %v276
        %v376 = vunpack.c.l.b16 %v277
        %v377 = vunpack.c.h.b16 %v277
        %v378 = vunpack.c.l.b16 %v278
        %v379 = vunpack.c.h.b16 %v278
        %v380 = vunpack.c.l.b16 %v279
        %v381 = vunpack.c.h.b16 %v279
        %v382 = vunpack.c.l.b16 %v280
        %v383 = vunpack.c.h.b16 %v280
        %v384 = vunpack.c.l.b16 %v281
        %v385 = vunpack.c.h.b16 %v281
        %v386 = vunpack.c.l.b16 %v282
        %v387 = vunpack.c.h.b16 %v282
        %v388 = vunpack.c.l.b16 %v283
        %v389 = vunpack.c.h.b16 %v283
        %v390 = vpack.c.b16 %v328, %v326
        %v391 = vpack.c.b16 %v329, %v327
        %v392 = vpack.c.b16 %v332, %v330
        %v393 = vpack.c.b16 %v333, %v331
        %v394 = vpack.c.b16 %v336, %v334
        %v395 = vpack.c.b16 %v337, %v335
        %v396 = vpack.c.b16 %v340, %v338
        %v397 = vpack.c.b16 %v341, %v339
        %v398 = vpack.c.b16 %v344, %v342
        %v399 = vpack.c.b16 %v345, %v343
        %v400 = vpack.c.b16 %v348, %v346
        %v401 = vpack.c.b16 %v349, %v347
        %v402 = vpack.c.b16 %v352, %v350
        %v403 = vpack.c.b16 %v353, %v351
        %v404 = vpack.c.b16 %v356, %v354
        %v405 = vpack.c.b16 %v357, %v355
        %v406 = vpack.c.b16 %v360, %v358
        %v407 = vpack.c.b16 %v361, %v359
        %v408 = vpack.c.b16 %v364, %v362
        %v409 = vpack.c.b16 %v365, %v363
        %v410 = vpack.c.b16 %v368, %v366
        %v411 = vpack.c.b16 %v369, %v367
        %v412 = vpack.c.b16 %v372, %v370
        %v413 = vpack.c.b16 %v373, %v371
        %v414 = vpack.c.b16 %v376, %v374
        %v415 = vpack.c.b16 %v377, %v375
        %v416 = vpack.c.b16 %v380, %v378
        %v417 = vpack.c.b16 %v381, %v379
        %v418 = vpack.c.b16 %v384, %v382
        %v419 = vpack.c.b16 %v385, %v383
        %v420 = vpack.c.b16 %v388, %v386
        %v421 = vpack.c.b16 %v389, %v387
        %454 = vmatprep.subr.bf16.mxu0 %v391
        %455 = vmatpush1.bf16.msra.mxu0 %v390
        %456 = vmatprep.subr.bf16.mxu0 %v393
        %457 = vmatpush1.bf16.msra.mxu0 %v392
        %458 = vmatprep.subr.bf16.mxu0 %v395
        %459 = vmatpush1.bf16.msra.mxu0 %v394
        %460 = vmatprep.subr.bf16.mxu0 %v397
        %461 = vmatpush1.bf16.msra.mxu0 %v396
        %462 = vmatprep.subr.bf16.mxu0 %v399
        %463 = vmatpush1.bf16.msra.mxu0 %v398
        %464 = vmatprep.subr.bf16.mxu0 %v401
        %465 = vmatpush1.bf16.msra.mxu0 %v400
        %466 = vmatprep.subr.bf16.mxu0 %v403
        %467 = vmatpush1.bf16.msra.mxu0 %v402
        %468 = vmatprep.subr.bf16.mxu0 %v405
        %469 = vmatpush1.bf16.msra.mxu0 %v404
        %470 = vmatprep.subr.bf16.mxu0 %v407
        %471 = vmatpush1.bf16.msra.mxu0 %v406
        %472 = vmatprep.subr.bf16.mxu0 %v409
        %473 = vmatpush1.bf16.msra.mxu0 %v408
        %474 = vmatprep.subr.bf16.mxu0 %v411
        %475 = vmatpush1.bf16.msra.mxu0 %v410
        %476 = vmatprep.subr.bf16.mxu0 %v413
        %477 = vmatpush1.bf16.msra.mxu0 %v412
        %478 = vmatprep.subr.bf16.mxu0 %v415
        %479 = vmatpush1.bf16.msra.mxu0 %v414
        %480 = vmatprep.subr.bf16.mxu0 %v417
        %481 = vmatpush1.bf16.msra.mxu0 %v416
        %482 = vmatprep.subr.bf16.mxu0 %v419
        %483 = vmatpush1.bf16.msra.mxu0 %v418
        %484 = vmatprep.subr.bf16.mxu0 %v421
        %485 = vmatpush1.bf16.msra.mxu0 %v420
        %486 = vmatprep.mubr.bf16.mxu0 %v291
        %487 = vmatmul.mubr.bf16.gmra.mrb[0].mxu0 %v290
        %v488 = vpop.f32.mrb[0].mxu0
        %v489 = vadd.f32 0.0, %v488
        %v490 = vpop.f32.mrb[0].mxu0
        %v491 = vadd.f32 0.0, %v490
        %v492 = vpop.f32.mrb[0].mxu0
        %v493 = vadd.f32 0.0, %v492
        %v494 = vpop.f32.mrb[0].mxu0
        %v495 = vadd.f32 0.0, %v494
        %496 = vdwg.mxu0
        %v497 = vadd.f32 %v248, %v489
        %v498 = vadd.f32 %v249, %v491
        %v499 = vadd.f32 %v248, %v493
        %v500 = vadd.f32 %v249, %v495
        %v501 = vld [vmem:[%s201] sm:$0xff]
        %v502 = vld [vmem:[%s201 + $0x8] sm:$0xff]
        %v503 = vld [vmem:[%s201 + $0x10] sm:$0x11]
        %s504 = scalar_lea.vmem [#allocation4], 256
        %v505 = vld [vmem:[%s504] sm:$0xff]
        %v506 = vld [vmem:[%s504 + $0x8] sm:$0xff]
        %v507 = vld [vmem:[%s504 + $0x10] sm:$0xff]
        %v508 = vld [vmem:[%s504 + $0x18] sm:$0xff]
        %v509 = vld [vmem:[%s504 + $0x20] sm:$0xff]
        %v510 = vld [vmem:[%s504 + $0x28] sm:$0xff]
        %v511 = vld [vmem:[%s504 + $0x30] sm:$0xff]
        %v512 = vld [vmem:[%s504 + $0x38] sm:$0xff]
        %v513 = vld [vmem:[%s504 + $0x40] sm:$0xff]
        %v514 = vld [vmem:[%s504 + $0x48] sm:$0xff]
        %v515 = vld [vmem:[%s504 + $0x50] sm:$0xff]
        %v516 = vld [vmem:[%s504 + $0x58] sm:$0xff]
        %v517 = vld [vmem:[%s504 + $0x60] sm:$0xff]
        %v518 = vld [vmem:[%s504 + $0x68] sm:$0xff]
        %v519 = vld [vmem:[%s504 + $0x70] sm:$0xff]
        %v520 = vld [vmem:[%s504 + $0x78] sm:$0xff]
        %v521 = vld [vmem:[%s504 + $0x80] sm:$0xff]
        %v522 = vld [vmem:[%s504 + $0x88] sm:$0xff]
        %v523 = vld [vmem:[%s504 + $0x90] sm:$0xff]
        %v524 = vld [vmem:[%s504 + $0x98] sm:$0xff]
        %v525 = vld [vmem:[%s504 + $0xa0] sm:$0xff]
        %v526 = vld [vmem:[%s504 + $0xa8] sm:$0xff]
        %v527 = vld [vmem:[%s504 + $0xb0] sm:$0xff]
        %v528 = vld [vmem:[%s504 + $0xb8] sm:$0xff]
        %v529 = vld [vmem:[%s504 + $0xc0] sm:$0xff]
        %v530 = vld [vmem:[%s504 + $0xc8] sm:$0xff]
        %v531 = vld [vmem:[%s504 + $0xd0] sm:$0xff]
        %v532 = vld [vmem:[%s504 + $0xd8] sm:$0xff]
        %v533 = vld [vmem:[%s504 + $0xe0] sm:$0xff]
        %v534 = vld [vmem:[%s504 + $0xe8] sm:$0xff]
        %v535 = vld [vmem:[%s504 + $0xf0] sm:$0xff]
        %v536 = vld [vmem:[%s504 + $0xf8] sm:$0xff]
        %v540 = vunpack.c.l.b16 %v501
        %v541 = vunpack.c.h.b16 %v501
        %v542 = vunpack.c.l.b16 %v502
        %v543 = vunpack.c.h.b16 %v502
        %v544 = vunpack.c.l.b16 %v503
        %v545 = vunpack.c.h.b16 %v503
        %v546 = vpack.c.b16 %v542, %v540
        %v547 = vpack.c.b16 %v543, %v541
        %v548 = vpack.c.b16 %v544, %v544
        %v549 = vpack.c.b16 %v545, %v545
        %vm550 = vsmask.f32 7424
        %v552 = vshrl.u32 %v546, 16
        %v554 = vshll.u32 %v546, 16
        %v556 = vrot.slane %v554, 1
        %v557 = vor.u32 %v552, %v556
        %v559 = vshll.u32 %v548, 16
        %v561 = vrot.slane %v559, 1
        %v562 = vsel %vm550, %v557, %v561
        %v564 = vshrl.u32 %v547, 16
        %v566 = vshll.u32 %v547, 16
        %v568 = vrot.slane %v566, 1
        %v569 = vor.u32 %v564, %v568
        %v571 = vshll.u32 %v549, 16
        %v573 = vrot.slane %v571, 1
        %v574 = vsel %vm550, %v569, %v573
        %v609 = vunpack.c.l.b16 %v505
        %v610 = vunpack.c.h.b16 %v505
        %v611 = vunpack.c.l.b16 %v506
        %v612 = vunpack.c.h.b16 %v506
        %v613 = vunpack.c.l.b16 %v507
        %v614 = vunpack.c.h.b16 %v507
        %v615 = vunpack.c.l.b16 %v508
        %v616 = vunpack.c.h.b16 %v508
        %v617 = vunpack.c.l.b16 %v509
        %v618 = vunpack.c.h.b16 %v509
        %v619 = vunpack.c.l.b16 %v510
        %v620 = vunpack.c.h.b16 %v510
        %v621 = vunpack.c.l.b16 %v511
        %v622 = vunpack.c.h.b16 %v511
        %v623 = vunpack.c.l.b16 %v512
        %v624 = vunpack.c.h.b16 %v512
        %v625 = vunpack.c.l.b16 %v513
        %v626 = vunpack.c.h.b16 %v513
        %v627 = vunpack.c.l.b16 %v514
        %v628 = vunpack.c.h.b16 %v514
        %v629 = vunpack.c.l.b16 %v515
        %v630 = vunpack.c.h.b16 %v515
        %v631 = vunpack.c.l.b16 %v516
        %v632 = vunpack.c.h.b16 %v516
        %v633 = vunpack.c.l.b16 %v517
        %v634 = vunpack.c.h.b16 %v517
        %v635 = vunpack.c.l.b16 %v518
        %v636 = vunpack.c.h.b16 %v518
        %v637 = vunpack.c.l.b16 %v519
        %v638 = vunpack.c.h.b16 %v519
        %v639 = vunpack.c.l.b16 %v520
        %v640 = vunpack.c.h.b16 %v520
        %v641 = vunpack.c.l.b16 %v521
        %v642 = vunpack.c.h.b16 %v521
        %v643 = vunpack.c.l.b16 %v522
        %v644 = vunpack.c.h.b16 %v522
        %v645 = vunpack.c.l.b16 %v523
        %v646 = vunpack.c.h.b16 %v523
        %v647 = vunpack.c.l.b16 %v524
        %v648 = vunpack.c.h.b16 %v524
        %v649 = vunpack.c.l.b16 %v525
        %v650 = vunpack.c.h.b16 %v525
        %v651 = vunpack.c.l.b16 %v526
        %v652 = vunpack.c.h.b16 %v526
        %v653 = vunpack.c.l.b16 %v527
        %v654 = vunpack.c.h.b16 %v527
        %v655 = vunpack.c.l.b16 %v528
        %v656 = vunpack.c.h.b16 %v528
        %v657 = vunpack.c.l.b16 %v529
        %v658 = vunpack.c.h.b16 %v529
        %v659 = vunpack.c.l.b16 %v530
        %v660 = vunpack.c.h.b16 %v530
        %v661 = vunpack.c.l.b16 %v531
        %v662 = vunpack.c.h.b16 %v531
        %v663 = vunpack.c.l.b16 %v532
        %v664 = vunpack.c.h.b16 %v532
        %v665 = vunpack.c.l.b16 %v533
        %v666 = vunpack.c.h.b16 %v533
        %v667 = vunpack.c.l.b16 %v534
        %v668 = vunpack.c.h.b16 %v534
        %v669 = vunpack.c.l.b16 %v535
        %v670 = vunpack.c.h.b16 %v535
        %v671 = vunpack.c.l.b16 %v536
        %v672 = vunpack.c.h.b16 %v536
        %v673 = vpack.c.b16 %v611, %v609
        %v674 = vpack.c.b16 %v612, %v610
        %v675 = vpack.c.b16 %v615, %v613
        %v676 = vpack.c.b16 %v616, %v614
        %v677 = vpack.c.b16 %v619, %v617
        %v678 = vpack.c.b16 %v620, %v618
        %v679 = vpack.c.b16 %v623, %v621
        %v680 = vpack.c.b16 %v624, %v622
        %v681 = vpack.c.b16 %v627, %v625
        %v682 = vpack.c.b16 %v628, %v626
        %v683 = vpack.c.b16 %v631, %v629
        %v684 = vpack.c.b16 %v632, %v630
        %v685 = vpack.c.b16 %v635, %v633
        %v686 = vpack.c.b16 %v636, %v634
        %v687 = vpack.c.b16 %v639, %v637
        %v688 = vpack.c.b16 %v640, %v638
        %v689 = vpack.c.b16 %v643, %v641
        %v690 = vpack.c.b16 %v644, %v642
        %v691 = vpack.c.b16 %v647, %v645
        %v692 = vpack.c.b16 %v648, %v646
        %v693 = vpack.c.b16 %v651, %v649
        %v694 = vpack.c.b16 %v652, %v650
        %v695 = vpack.c.b16 %v655, %v653
        %v696 = vpack.c.b16 %v656, %v654
        %v697 = vpack.c.b16 %v659, %v657
        %v698 = vpack.c.b16 %v660, %v658
        %v699 = vpack.c.b16 %v663, %v661
        %v700 = vpack.c.b16 %v664, %v662
        %v701 = vpack.c.b16 %v667, %v665
        %v702 = vpack.c.b16 %v668, %v666
        %v703 = vpack.c.b16 %v671, %v669
        %v704 = vpack.c.b16 %v672, %v670
        %737 = vmatprep.subr.bf16.mxu0 %v674
        %738 = vmatpush1.bf16.msra.mxu0 %v673
        %739 = vmatprep.subr.bf16.mxu0 %v676
        %740 = vmatpush1.bf16.msra.mxu0 %v675
        %741 = vmatprep.subr.bf16.mxu0 %v678
        %742 = vmatpush1.bf16.msra.mxu0 %v677
        %743 = vmatprep.subr.bf16.mxu0 %v680
        %744 = vmatpush1.bf16.msra.mxu0 %v679
        %745 = vmatprep.subr.bf16.mxu0 %v682
        %746 = vmatpush1.bf16.msra.mxu0 %v681
        %747 = vmatprep.subr.bf16.mxu0 %v684
        %748 = vmatpush1.bf16.msra.mxu0 %v683
        %749 = vmatprep.subr.bf16.mxu0 %v686
        %750 = vmatpush1.bf16.msra.mxu0 %v685
        %751 = vmatprep.subr.bf16.mxu0 %v688
        %752 = vmatpush1.bf16.msra.mxu0 %v687
        %753 = vmatprep.subr.bf16.mxu0 %v690
        %754 = vmatpush1.bf16.msra.mxu0 %v689
        %755 = vmatprep.subr.bf16.mxu0 %v692
        %756 = vmatpush1.bf16.msra.mxu0 %v691
        %757 = vmatprep.subr.bf16.mxu0 %v694
        %758 = vmatpush1.bf16.msra.mxu0 %v693
        %759 = vmatprep.subr.bf16.mxu0 %v696
        %760 = vmatpush1.bf16.msra.mxu0 %v695
        %761 = vmatprep.subr.bf16.mxu0 %v698
        %762 = vmatpush1.bf16.msra.mxu0 %v697
        %763 = vmatprep.subr.bf16.mxu0 %v700
        %764 = vmatpush1.bf16.msra.mxu0 %v699
        %765 = vmatprep.subr.bf16.mxu0 %v702
        %766 = vmatpush1.bf16.msra.mxu0 %v701
        %767 = vmatprep.subr.bf16.mxu0 %v704
        %768 = vmatpush1.bf16.msra.mxu0 %v703
        %769 = vmatprep.mubr.bf16.mxu0 %v574
        %770 = vmatmul.mubr.bf16.gmra.mrb[0].mxu0 %v562
        %v771 = vpop.f32.mrb[0].mxu0
        %v772 = vadd.f32 0.0, %v771
        %v773 = vpop.f32.mrb[0].mxu0
        %v774 = vadd.f32 0.0, %v773
        %v775 = vpop.f32.mrb[0].mxu0
        %v776 = vadd.f32 0.0, %v775
        %v777 = vpop.f32.mrb[0].mxu0
        %v778 = vadd.f32 0.0, %v777
        %779 = vdwg.mxu0
        %v780 = vadd.f32 %v497, %v772
        %v781 = vadd.f32 %v498, %v774
        %v782 = vadd.f32 %v499, %v776
        %v783 = vadd.f32 %v500, %v778
        %v784 = vld [vmem:[%s201] sm:$0xee]
        %s785 = scalar_lea.vmem [#allocation4], 512
        %v786 = vld [vmem:[%s785] sm:$0xff]
        %v787 = vld [vmem:[%s785 + $0x8] sm:$0xff]
        %v788 = vld [vmem:[%s785 + $0x10] sm:$0xff]
        %v789 = vld [vmem:[%s785 + $0x18] sm:$0xff]
        %v790 = vld [vmem:[%s785 + $0x20] sm:$0xff]
        %v791 = vld [vmem:[%s785 + $0x28] sm:$0xff]
        %v792 = vld [vmem:[%s785 + $0x30] sm:$0xff]
        %v793 = vld [vmem:[%s785 + $0x38] sm:$0xff]
        %v794 = vld [vmem:[%s785 + $0x40] sm:$0xff]
        %v795 = vld [vmem:[%s785 + $0x48] sm:$0xff]
        %v796 = vld [vmem:[%s785 + $0x50] sm:$0xff]
        %v797 = vld [vmem:[%s785 + $0x58] sm:$0xff]
        %v798 = vld [vmem:[%s785 + $0x60] sm:$0xff]
        %v799 = vld [vmem:[%s785 + $0x68] sm:$0xff]
        %v800 = vld [vmem:[%s785 + $0x70] sm:$0xff]
        %v801 = vld [vmem:[%s785 + $0x78] sm:$0xff]
        %v802 = vld [vmem:[%s785 + $0x80] sm:$0xff]
        %v803 = vld [vmem:[%s785 + $0x88] sm:$0xff]
        %v804 = vld [vmem:[%s785 + $0x90] sm:$0xff]
        %v805 = vld [vmem:[%s785 + $0x98] sm:$0xff]
        %v806 = vld [vmem:[%s785 + $0xa0] sm:$0xff]
        %v807 = vld [vmem:[%s785 + $0xa8] sm:$0xff]
        %v808 = vld [vmem:[%s785 + $0xb0] sm:$0xff]
        %v809 = vld [vmem:[%s785 + $0xb8] sm:$0xff]
        %v810 = vld [vmem:[%s785 + $0xc0] sm:$0xff]
        %v811 = vld [vmem:[%s785 + $0xc8] sm:$0xff]
        %v812 = vld [vmem:[%s785 + $0xd0] sm:$0xff]
        %v813 = vld [vmem:[%s785 + $0xd8] sm:$0xff]
        %v814 = vld [vmem:[%s785 + $0xe0] sm:$0xff]
        %v815 = vld [vmem:[%s785 + $0xe8] sm:$0xff]
        %v816 = vld [vmem:[%s785 + $0xf0] sm:$0xff]
        %v817 = vld [vmem:[%s785 + $0xf8] sm:$0xff]
        %v819 = vunpack.c.l.b16 %v784
        %v820 = vunpack.c.h.b16 %v784
        %v821 = vpack.c.b16 %v542, %v819
        %v822 = vpack.c.b16 %v543, %v820
        %vm823 = vcmask 1046528
        %v824 = vrot.slane %v821, 1
        %v825 = vrot.slane %v548, 1
        %v826 = vsel %vm823, %v824, %v825
        %v827 = vrot.slane %v822, 1
        %v828 = vrot.slane %v549, 1
        %v829 = vsel %vm823, %v827, %v828
        %v864 = vunpack.c.l.b16 %v786
        %v865 = vunpack.c.h.b16 %v786
        %v866 = vunpack.c.l.b16 %v787
        %v867 = vunpack.c.h.b16 %v787
        %v868 = vunpack.c.l.b16 %v788
        %v869 = vunpack.c.h.b16 %v788
        %v870 = vunpack.c.l.b16 %v789
        %v871 = vunpack.c.h.b16 %v789
        %v872 = vunpack.c.l.b16 %v790
        %v873 = vunpack.c.h.b16 %v790
        %v874 = vunpack.c.l.b16 %v791
        %v875 = vunpack.c.h.b16 %v791
        %v876 = vunpack.c.l.b16 %v792
        %v877 = vunpack.c.h.b16 %v792
        %v878 = vunpack.c.l.b16 %v793
        %v879 = vunpack.c.h.b16 %v793
        %v880 = vunpack.c.l.b16 %v794
        %v881 = vunpack.c.h.b16 %v794
        %v882 = vunpack.c.l.b16 %v795
        %v883 = vunpack.c.h.b16 %v795
        %v884 = vunpack.c.l.b16 %v796
        %v885 = vunpack.c.h.b16 %v796
        %v886 = vunpack.c.l.b16 %v797
        %v887 = vunpack.c.h.b16 %v797
        %v888 = vunpack.c.l.b16 %v798
        %v889 = vunpack.c.h.b16 %v798
        %v890 = vunpack.c.l.b16 %v799
        %v891 = vunpack.c.h.b16 %v799
        %v892 = vunpack.c.l.b16 %v800
        %v893 = vunpack.c.h.b16 %v800
        %v894 = vunpack.c.l.b16 %v801
        %v895 = vunpack.c.h.b16 %v801
        %v896 = vunpack.c.l.b16 %v802
        %v897 = vunpack.c.h.b16 %v802
        %v898 = vunpack.c.l.b16 %v803
        %v899 = vunpack.c.h.b16 %v803
        %v900 = vunpack.c.l.b16 %v804
        %v901 = vunpack.c.h.b16 %v804
        %v902 = vunpack.c.l.b16 %v805
        %v903 = vunpack.c.h.b16 %v805
        %v904 = vunpack.c.l.b16 %v806
        %v905 = vunpack.c.h.b16 %v806
        %v906 = vunpack.c.l.b16 %v807
        %v907 = vunpack.c.h.b16 %v807
        %v908 = vunpack.c.l.b16 %v808
        %v909 = vunpack.c.h.b16 %v808
        %v910 = vunpack.c.l.b16 %v809
        %v911 = vunpack.c.h.b16 %v809
        %v912 = vunpack.c.l.b16 %v810
        %v913 = vunpack.c.h.b16 %v810
        %v914 = vunpack.c.l.b16 %v811
        %v915 = vunpack.c.h.b16 %v811
        %v916 = vunpack.c.l.b16 %v812
        %v917 = vunpack.c.h.b16 %v812
        %v918 = vunpack.c.l.b16 %v813
        %v919 = vunpack.c.h.b16 %v813
        %v920 = vunpack.c.l.b16 %v814
        %v921 = vunpack.c.h.b16 %v814
        %v922 = vunpack.c.l.b16 %v815
        %v923 = vunpack.c.h.b16 %v815
        %v924 = vunpack.c.l.b16 %v816
        %v925 = vunpack.c.h.b16 %v816
        %v926 = vunpack.c.l.b16 %v817
        %v927 = vunpack.c.h.b16 %v817
        %v928 = vpack.c.b16 %v866, %v864
        %v929 = vpack.c.b16 %v867, %v865
        %v930 = vpack.c.b16 %v870, %v868
        %v931 = vpack.c.b16 %v871, %v869
        %v932 = vpack.c.b16 %v874, %v872
        %v933 = vpack.c.b16 %v875, %v873
        %v934 = vpack.c.b16 %v878, %v876
        %v935 = vpack.c.b16 %v879, %v877
        %v936 = vpack.c.b16 %v882, %v880
        %v937 = vpack.c.b16 %v883, %v881
        %v938 = vpack.c.b16 %v886, %v884
        %v939 = vpack.c.b16 %v887, %v885
        %v940 = vpack.c.b16 %v890, %v888
        %v941 = vpack.c.b16 %v891, %v889
        %v942 = vpack.c.b16 %v894, %v892
        %v943 = vpack.c.b16 %v895, %v893
        %v944 = vpack.c.b16 %v898, %v896
        %v945 = vpack.c.b16 %v899, %v897
        %v946 = vpack.c.b16 %v902, %v900
        %v947 = vpack.c.b16 %v903, %v901
        %v948 = vpack.c.b16 %v906, %v904
        %v949 = vpack.c.b16 %v907, %v905
        %v950 = vpack.c.b16 %v910, %v908
        %v951 = vpack.c.b16 %v911, %v909
        %v952 = vpack.c.b16 %v914, %v912
        %v953 = vpack.c.b16 %v915, %v913
        %v954 = vpack.c.b16 %v918, %v916
        %v955 = vpack.c.b16 %v919, %v917
        %v956 = vpack.c.b16 %v922, %v920
        %v957 = vpack.c.b16 %v923, %v921
        %v958 = vpack.c.b16 %v926, %v924
        %v959 = vpack.c.b16 %v927, %v925
        %992 = vmatprep.subr.bf16.mxu0 %v929
        %993 = vmatpush1.bf16.msra.mxu0 %v928
        %994 = vmatprep.subr.bf16.mxu0 %v931
        %995 = vmatpush1.bf16.msra.mxu0 %v930
        %996 = vmatprep.subr.bf16.mxu0 %v933
        %997 = vmatpush1.bf16.msra.mxu0 %v932
        %998 = vmatprep.subr.bf16.mxu0 %v935
        %999 = vmatpush1.bf16.msra.mxu0 %v934
        %1000 = vmatprep.subr.bf16.mxu0 %v937
        %1001 = vmatpush1.bf16.msra.mxu0 %v936
        %1002 = vmatprep.subr.bf16.mxu0 %v939
        %1003 = vmatpush1.bf16.msra.mxu0 %v938
        %1004 = vmatprep.subr.bf16.mxu0 %v941
        %1005 = vmatpush1.bf16.msra.mxu0 %v940
        %1006 = vmatprep.subr.bf16.mxu0 %v943
        %1007 = vmatpush1.bf16.msra.mxu0 %v942
        %1008 = vmatprep.subr.bf16.mxu0 %v945
        %1009 = vmatpush1.bf16.msra.mxu0 %v944
        %1010 = vmatprep.subr.bf16.mxu0 %v947
        %1011 = vmatpush1.bf16.msra.mxu0 %v946
        %1012 = vmatprep.subr.bf16.mxu0 %v949
        %1013 = vmatpush1.bf16.msra.mxu0 %v948
        %1014 = vmatprep.subr.bf16.mxu0 %v951
        %1015 = vmatpush1.bf16.msra.mxu0 %v950
        %1016 = vmatprep.subr.bf16.mxu0 %v953
        %1017 = vmatpush1.bf16.msra.mxu0 %v952
        %1018 = vmatprep.subr.bf16.mxu0 %v955
        %1019 = vmatpush1.bf16.msra.mxu0 %v954
        %1020 = vmatprep.subr.bf16.mxu0 %v957
        %1021 = vmatpush1.bf16.msra.mxu0 %v956
        %1022 = vmatprep.subr.bf16.mxu0 %v959
        %1023 = vmatpush1.bf16.msra.mxu0 %v958
        %1024 = vmatprep.mubr.bf16.mxu0 %v829
        %1025 = vmatmul.mubr.bf16.gmra.mrb[0].mxu0 %v826
        %v1026 = vpop.f32.mrb[0].mxu0
        %v1027 = vadd.f32 0.0, %v1026
        %v1028 = vpop.f32.mrb[0].mxu0
        %v1029 = vadd.f32 0.0, %v1028
        %v1030 = vpop.f32.mrb[0].mxu0
        %v1031 = vadd.f32 0.0, %v1030
        %v1032 = vpop.f32.mrb[0].mxu0
        %v1033 = vadd.f32 0.0, %v1032
        %1034 = vdwg.mxu0
        %v1035 = vadd.f32 %v780, %v1027
        %v1036 = vadd.f32 %v781, %v1029
        %v1037 = vadd.f32 %v782, %v1031
        %v1038 = vadd.f32 %v783, %v1033
        %v1039 = vld [vmem:[%s201 + $0x10] sm:$0xff]
        %s1040 = scalar_lea.vmem [#allocation4], 768
        %v1041 = vld [vmem:[%s1040] sm:$0xff]
        %v1042 = vld [vmem:[%s1040 + $0x8] sm:$0xff]
        %v1043 = vld [vmem:[%s1040 + $0x10] sm:$0xff]
        %v1044 = vld [vmem:[%s1040 + $0x18] sm:$0xff]
        %v1045 = vld [vmem:[%s1040 + $0x20] sm:$0xff]
        %v1046 = vld [vmem:[%s1040 + $0x28] sm:$0xff]
        %v1047 = vld [vmem:[%s1040 + $0x30] sm:$0xff]
        %v1048 = vld [vmem:[%s1040 + $0x38] sm:$0xff]
        %v1049 = vld [vmem:[%s1040 + $0x40] sm:$0xff]
        %v1050 = vld [vmem:[%s1040 + $0x48] sm:$0xff]
        %v1051 = vld [vmem:[%s1040 + $0x50] sm:$0xff]
        %v1052 = vld [vmem:[%s1040 + $0x58] sm:$0xff]
        %v1053 = vld [vmem:[%s1040 + $0x60] sm:$0xff]
        %v1054 = vld [vmem:[%s1040 + $0x68] sm:$0xff]
        %v1055 = vld [vmem:[%s1040 + $0x70] sm:$0xff]
        %v1056 = vld [vmem:[%s1040 + $0x78] sm:$0xff]
        %v1057 = vld [vmem:[%s1040 + $0x80] sm:$0xff]
        %v1058 = vld [vmem:[%s1040 + $0x88] sm:$0xff]
        %v1059 = vld [vmem:[%s1040 + $0x90] sm:$0xff]
        %v1060 = vld [vmem:[%s1040 + $0x98] sm:$0xff]
        %v1061 = vld [vmem:[%s1040 + $0xa0] sm:$0xff]
        %v1062 = vld [vmem:[%s1040 + $0xa8] sm:$0xff]
        %v1063 = vld [vmem:[%s1040 + $0xb0] sm:$0xff]
        %v1064 = vld [vmem:[%s1040 + $0xb8] sm:$0xff]
        %v1065 = vld [vmem:[%s1040 + $0xc0] sm:$0xff]
        %v1066 = vld [vmem:[%s1040 + $0xc8] sm:$0xff]
        %v1067 = vld [vmem:[%s1040 + $0xd0] sm:$0xff]
        %v1068 = vld [vmem:[%s1040 + $0xd8] sm:$0xff]
        %v1069 = vld [vmem:[%s1040 + $0xe0] sm:$0xff]
        %v1070 = vld [vmem:[%s1040 + $0xe8] sm:$0xff]
        %v1071 = vld [vmem:[%s1040 + $0xf0] sm:$0xff]
        %v1072 = vld [vmem:[%s1040 + $0xf8] sm:$0xff]
        %v1074 = vunpack.c.l.b16 %v1039
        %v1075 = vunpack.c.h.b16 %v1039
        %v1076 = vpack.c.b16 %v1074, %v542
        %v1077 = vpack.c.b16 %v1075, %v543
        %v1112 = vunpack.c.l.b16 %v1041
        %v1113 = vunpack.c.h.b16 %v1041
        %v1114 = vunpack.c.l.b16 %v1042
        %v1115 = vunpack.c.h.b16 %v1042
        %v1116 = vunpack.c.l.b16 %v1043
        %v1117 = vunpack.c.h.b16 %v1043
        %v1118 = vunpack.c.l.b16 %v1044
        %v1119 = vunpack.c.h.b16 %v1044
        %v1120 = vunpack.c.l.b16 %v1045
        %v1121 = vunpack.c.h.b16 %v1045
        %v1122 = vunpack.c.l.b16 %v1046
        %v1123 = vunpack.c.h.b16 %v1046
        %v1124 = vunpack.c.l.b16 %v1047
        %v1125 = vunpack.c.h.b16 %v1047
        %v1126 = vunpack.c.l.b16 %v1048
        %v1127 = vunpack.c.h.b16 %v1048
        %v1128 = vunpack.c.l.b16 %v1049
        %v1129 = vunpack.c.h.b16 %v1049
        %v1130 = vunpack.c.l.b16 %v1050
        %v1131 = vunpack.c.h.b16 %v1050
        %v1132 = vunpack.c.l.b16 %v1051
        %v1133 = vunpack.c.h.b16 %v1051
        %v1134 = vunpack.c.l.b16 %v1052
        %v1135 = vunpack.c.h.b16 %v1052
        %v1136 = vunpack.c.l.b16 %v1053
        %v1137 = vunpack.c.h.b16 %v1053
        %v1138 = vunpack.c.l.b16 %v1054
        %v1139 = vunpack.c.h.b16 %v1054
        %v1140 = vunpack.c.l.b16 %v1055
        %v1141 = vunpack.c.h.b16 %v1055
        %v1142 = vunpack.c.l.b16 %v1056
        %v1143 = vunpack.c.h.b16 %v1056
        %v1144 = vunpack.c.l.b16 %v1057
        %v1145 = vunpack.c.h.b16 %v1057
        %v1146 = vunpack.c.l.b16 %v1058
        %v1147 = vunpack.c.h.b16 %v1058
        %v1148 = vunpack.c.l.b16 %v1059
        %v1149 = vunpack.c.h.b16 %v1059
        %v1150 = vunpack.c.l.b16 %v1060
        %v1151 = vunpack.c.h.b16 %v1060
        %v1152 = vunpack.c.l.b16 %v1061
        %v1153 = vunpack.c.h.b16 %v1061
        %v1154 = vunpack.c.l.b16 %v1062
        %v1155 = vunpack.c.h.b16 %v1062
        %v1156 = vunpack.c.l.b16 %v1063
        %v1157 = vunpack.c.h.b16 %v1063
        %v1158 = vunpack.c.l.b16 %v1064
        %v1159 = vunpack.c.h.b16 %v1064
        %v1160 = vunpack.c.l.b16 %v1065
        %v1161 = vunpack.c.h.b16 %v1065
        %v1162 = vunpack.c.l.b16 %v1066
        %v1163 = vunpack.c.h.b16 %v1066
        %v1164 = vunpack.c.l.b16 %v1067
        %v1165 = vunpack.c.h.b16 %v1067
        %v1166 = vunpack.c.l.b16 %v1068
        %v1167 = vunpack.c.h.b16 %v1068
        %v1168 = vunpack.c.l.b16 %v1069
        %v1169 = vunpack.c.h.b16 %v1069
        %v1170 = vunpack.c.l.b16 %v1070
        %v1171 = vunpack.c.h.b16 %v1070
        %v1172 = vunpack.c.l.b16 %v1071
        %v1173 = vunpack.c.h.b16 %v1071
        %v1174 = vunpack.c.l.b16 %v1072
        %v1175 = vunpack.c.h.b16 %v1072
        %v1176 = vpack.c.b16 %v1114, %v1112
        %v1177 = vpack.c.b16 %v1115, %v1113
        %v1178 = vpack.c.b16 %v1118, %v1116
        %v1179 = vpack.c.b16 %v1119, %v1117
        %v1180 = vpack.c.b16 %v1122, %v1120
        %v1181 = vpack.c.b16 %v1123, %v1121
        %v1182 = vpack.c.b16 %v1126, %v1124
        %v1183 = vpack.c.b16 %v1127, %v1125
        %v1184 = vpack.c.b16 %v1130, %v1128
        %v1185 = vpack.c.b16 %v1131, %v1129
        %v1186 = vpack.c.b16 %v1134, %v1132
        %v1187 = vpack.c.b16 %v1135, %v1133
        %v1188 = vpack.c.b16 %v1138, %v1136
        %v1189 = vpack.c.b16 %v1139, %v1137
        %v1190 = vpack.c.b16 %v1142, %v1140
        %v1191 = vpack.c.b16 %v1143, %v1141
        %v1192 = vpack.c.b16 %v1146, %v1144
        %v1193 = vpack.c.b16 %v1147, %v1145
        %v1194 = vpack.c.b16 %v1150, %v1148
        %v1195 = vpack.c.b16 %v1151, %v1149
        %v1196 = vpack.c.b16 %v1154, %v1152
        %v1197 = vpack.c.b16 %v1155, %v1153
        %v1198 = vpack.c.b16 %v1158, %v1156
        %v1199 = vpack.c.b16 %v1159, %v1157
        %v1200 = vpack.c.b16 %v1162, %v1160
        %v1201 = vpack.c.b16 %v1163, %v1161
        %v1202 = vpack.c.b16 %v1166, %v1164
        %v1203 = vpack.c.b16 %v1167, %v1165
        %v1204 = vpack.c.b16 %v1170, %v1168
        %v1205 = vpack.c.b16 %v1171, %v1169
        %v1206 = vpack.c.b16 %v1174, %v1172
        %v1207 = vpack.c.b16 %v1175, %v1173
        %1240 = vmatprep.subr.bf16.mxu0 %v1177
        %1241 = vmatpush1.bf16.msra.mxu0 %v1176
        %1242 = vmatprep.subr.bf16.mxu0 %v1179
        %1243 = vmatpush1.bf16.msra.mxu0 %v1178
        %1244 = vmatprep.subr.bf16.mxu0 %v1181
        %1245 = vmatpush1.bf16.msra.mxu0 %v1180
        %1246 = vmatprep.subr.bf16.mxu0 %v1183
        %1247 = vmatpush1.bf16.msra.mxu0 %v1182
        %1248 = vmatprep.subr.bf16.mxu0 %v1185
        %1249 = vmatpush1.bf16.msra.mxu0 %v1184
        %1250 = vmatprep.subr.bf16.mxu0 %v1187
        %1251 = vmatpush1.bf16.msra.mxu0 %v1186
        %1252 = vmatprep.subr.bf16.mxu0 %v1189
        %1253 = vmatpush1.bf16.msra.mxu0 %v1188
        %1254 = vmatprep.subr.bf16.mxu0 %v1191
        %1255 = vmatpush1.bf16.msra.mxu0 %v1190
        %1256 = vmatprep.subr.bf16.mxu0 %v1193
        %1257 = vmatpush1.bf16.msra.mxu0 %v1192
        %1258 = vmatprep.subr.bf16.mxu0 %v1195
        %1259 = vmatpush1.bf16.msra.mxu0 %v1194
        %1260 = vmatprep.subr.bf16.mxu0 %v1197
        %1261 = vmatpush1.bf16.msra.mxu0 %v1196
        %1262 = vmatprep.subr.bf16.mxu0 %v1199
        %1263 = vmatpush1.bf16.msra.mxu0 %v1198
        %1264 = vmatprep.subr.bf16.mxu0 %v1201
        %1265 = vmatpush1.bf16.msra.mxu0 %v1200
        %1266 = vmatprep.subr.bf16.mxu0 %v1203
        %1267 = vmatpush1.bf16.msra.mxu0 %v1202
        %1268 = vmatprep.subr.bf16.mxu0 %v1205
        %1269 = vmatpush1.bf16.msra.mxu0 %v1204
        %1270 = vmatprep.subr.bf16.mxu0 %v1207
        %1271 = vmatpush1.bf16.msra.mxu0 %v1206
        %1272 = vmatprep.mubr.bf16.mxu0 %v1077
        %1273 = vmatmul.mubr.bf16.gmra.mrb[0].mxu0 %v1076
        %v1274 = vpop.f32.mrb[0].mxu0
        %v1275 = vadd.f32 0.0, %v1274
        %v1276 = vpop.f32.mrb[0].mxu0
        %v1277 = vadd.f32 0.0, %v1276
        %v1278 = vpop.f32.mrb[0].mxu0
        %v1279 = vadd.f32 0.0, %v1278
        %v1280 = vpop.f32.mrb[0].mxu0
        %v1281 = vadd.f32 0.0, %v1280
        %1282 = vdwg.mxu0
        %v1283 = vadd.f32 %v1035, %v1275
        %v1284 = vadd.f32 %v1036, %v1277
        %v1285 = vadd.f32 %v1037, %v1279
        %v1286 = vadd.f32 %v1038, %v1281
        %v1287 = vld [vmem:[%s201 + $0x8] sm:$0xff]
        %v1288 = vld [vmem:[%s201 + $0x10] sm:$0xff]
        %v1289 = vld [vmem:[%s201 + $0x18] sm:$0x11]
        %s1290 = scalar_lea.vmem [#allocation4], 1024
        %v1291 = vld [vmem:[%s1290] sm:$0xff]
        %v1292 = vld [vmem:[%s1290 + $0x8] sm:$0xff]
        %v1293 = vld [vmem:[%s1290 + $0x10] sm:$0xff]
        %v1294 = vld [vmem:[%s1290 + $0x18] sm:$0xff]
        %v1295 = vld [vmem:[%s1290 + $0x20] sm:$0xff]
        %v1296 = vld [vmem:[%s1290 + $0x28] sm:$0xff]
        %v1297 = vld [vmem:[%s1290 + $0x30] sm:$0xff]
        %v1298 = vld [vmem:[%s1290 + $0x38] sm:$0xff]
        %v1299 = vld [vmem:[%s1290 + $0x40] sm:$0xff]
        %v1300 = vld [vmem:[%s1290 + $0x48] sm:$0xff]
        %v1301 = vld [vmem:[%s1290 + $0x50] sm:$0xff]
        %v1302 = vld [vmem:[%s1290 + $0x58] sm:$0xff]
        %v1303 = vld [vmem:[%s1290 + $0x60] sm:$0xff]
        %v1304 = vld [vmem:[%s1290 + $0x68] sm:$0xff]
        %v1305 = vld [vmem:[%s1290 + $0x70] sm:$0xff]
        %v1306 = vld [vmem:[%s1290 + $0x78] sm:$0xff]
        %v1307 = vld [vmem:[%s1290 + $0x80] sm:$0xff]
        %v1308 = vld [vmem:[%s1290 + $0x88] sm:$0xff]
        %v1309 = vld [vmem:[%s1290 + $0x90] sm:$0xff]
        %v1310 = vld [vmem:[%s1290 + $0x98] sm:$0xff]
        %v1311 = vld [vmem:[%s1290 + $0xa0] sm:$0xff]
        %v1312 = vld [vmem:[%s1290 + $0xa8] sm:$0xff]
        %v1313 = vld [vmem:[%s1290 + $0xb0] sm:$0xff]
        %v1314 = vld [vmem:[%s1290 + $0xb8] sm:$0xff]
        %v1315 = vld [vmem:[%s1290 + $0xc0] sm:$0xff]
        %v1316 = vld [vmem:[%s1290 + $0xc8] sm:$0xff]
        %v1317 = vld [vmem:[%s1290 + $0xd0] sm:$0xff]
        %v1318 = vld [vmem:[%s1290 + $0xd8] sm:$0xff]
        %v1319 = vld [vmem:[%s1290 + $0xe0] sm:$0xff]
        %v1320 = vld [vmem:[%s1290 + $0xe8] sm:$0xff]
        %v1321 = vld [vmem:[%s1290 + $0xf0] sm:$0xff]
        %v1322 = vld [vmem:[%s1290 + $0xf8] sm:$0xff]
        %v1326 = vunpack.c.l.b16 %v1287
        %v1327 = vunpack.c.h.b16 %v1287
        %v1328 = vunpack.c.l.b16 %v1288
        %v1329 = vunpack.c.h.b16 %v1288
        %v1330 = vunpack.c.l.b16 %v1289
        %v1331 = vunpack.c.h.b16 %v1289
        %v1332 = vpack.c.b16 %v1328, %v1326
        %v1333 = vpack.c.b16 %v1329, %v1327
        %v1334 = vpack.c.b16 %v1330, %v1330
        %v1335 = vpack.c.b16 %v1331, %v1331
        %v1337 = vshrl.u32 %v1332, 16
        %v1339 = vshll.u32 %v1332, 16
        %v1341 = vrot.slane %v1339, 1
        %v1342 = vor.u32 %v1337, %v1341
        %v1344 = vshll.u32 %v1334, 16
        %v1346 = vrot.slane %v1344, 1
        %v1347 = vsel %vm550, %v1342, %v1346
        %v1349 = vshrl.u32 %v1333, 16
        %v1351 = vshll.u32 %v1333, 16
        %v1353 = vrot.slane %v1351, 1
        %v1354 = vor.u32 %v1349, %v1353
        %v1356 = vshll.u32 %v1335, 16
        %v1358 = vrot.slane %v1356, 1
        %v1359 = vsel %vm550, %v1354, %v1358
        %v1394 = vunpack.c.l.b16 %v1291
        %v1395 = vunpack.c.h.b16 %v1291
        %v1396 = vunpack.c.l.b16 %v1292
        %v1397 = vunpack.c.h.b16 %v1292
        %v1398 = vunpack.c.l.b16 %v1293
        %v1399 = vunpack.c.h.b16 %v1293
        %v1400 = vunpack.c.l.b16 %v1294
        %v1401 = vunpack.c.h.b16 %v1294
        %v1402 = vunpack.c.l.b16 %v1295
        %v1403 = vunpack.c.h.b16 %v1295
        %v1404 = vunpack.c.l.b16 %v1296
        %v1405 = vunpack.c.h.b16 %v1296
        %v1406 = vunpack.c.l.b16 %v1297
        %v1407 = vunpack.c.h.b16 %v1297
        %v1408 = vunpack.c.l.b16 %v1298
        %v1409 = vunpack.c.h.b16 %v1298
        %v1410 = vunpack.c.l.b16 %v1299
        %v1411 = vunpack.c.h.b16 %v1299
        %v1412 = vunpack.c.l.b16 %v1300
        %v1413 = vunpack.c.h.b16 %v1300
        %v1414 = vunpack.c.l.b16 %v1301
        %v1415 = vunpack.c.h.b16 %v1301
        %v1416 = vunpack.c.l.b16 %v1302
        %v1417 = vunpack.c.h.b16 %v1302
        %v1418 = vunpack.c.l.b16 %v1303
        %v1419 = vunpack.c.h.b16 %v1303
        %v1420 = vunpack.c.l.b16 %v1304
        %v1421 = vunpack.c.h.b16 %v1304
        %v1422 = vunpack.c.l.b16 %v1305
        %v1423 = vunpack.c.h.b16 %v1305
        %v1424 = vunpack.c.l.b16 %v1306
        %v1425 = vunpack.c.h.b16 %v1306
        %v1426 = vunpack.c.l.b16 %v1307
        %v1427 = vunpack.c.h.b16 %v1307
        %v1428 = vunpack.c.l.b16 %v1308
        %v1429 = vunpack.c.h.b16 %v1308
        %v1430 = vunpack.c.l.b16 %v1309
        %v1431 = vunpack.c.h.b16 %v1309
        %v1432 = vunpack.c.l.b16 %v1310
        %v1433 = vunpack.c.h.b16 %v1310
        %v1434 = vunpack.c.l.b16 %v1311
        %v1435 = vunpack.c.h.b16 %v1311
        %v1436 = vunpack.c.l.b16 %v1312
        %v1437 = vunpack.c.h.b16 %v1312
        %v1438 = vunpack.c.l.b16 %v1313
        %v1439 = vunpack.c.h.b16 %v1313
        %v1440 = vunpack.c.l.b16 %v1314
        %v1441 = vunpack.c.h.b16 %v1314
        %v1442 = vunpack.c.l.b16 %v1315
        %v1443 = vunpack.c.h.b16 %v1315
        %v1444 = vunpack.c.l.b16 %v1316
        %v1445 = vunpack.c.h.b16 %v1316
        %v1446 = vunpack.c.l.b16 %v1317
        %v1447 = vunpack.c.h.b16 %v1317
        %v1448 = vunpack.c.l.b16 %v1318
        %v1449 = vunpack.c.h.b16 %v1318
        %v1450 = vunpack.c.l.b16 %v1319
        %v1451 = vunpack.c.h.b16 %v1319
        %v1452 = vunpack.c.l.b16 %v1320
        %v1453 = vunpack.c.h.b16 %v1320
        %v1454 = vunpack.c.l.b16 %v1321
        %v1455 = vunpack.c.h.b16 %v1321
        %v1456 = vunpack.c.l.b16 %v1322
        %v1457 = vunpack.c.h.b16 %v1322
        %v1458 = vpack.c.b16 %v1396, %v1394
        %v1459 = vpack.c.b16 %v1397, %v1395
        %v1460 = vpack.c.b16 %v1400, %v1398
        %v1461 = vpack.c.b16 %v1401, %v1399
        %v1462 = vpack.c.b16 %v1404, %v1402
        %v1463 = vpack.c.b16 %v1405, %v1403
        %v1464 = vpack.c.b16 %v1408, %v1406
        %v1465 = vpack.c.b16 %v1409, %v1407
        %v1466 = vpack.c.b16 %v1412, %v1410
        %v1467 = vpack.c.b16 %v1413, %v1411
        %v1468 = vpack.c.b16 %v1416, %v1414
        %v1469 = vpack.c.b16 %v1417, %v1415
        %v1470 = vpack.c.b16 %v1420, %v1418
        %v1471 = vpack.c.b16 %v1421, %v1419
        %v1472 = vpack.c.b16 %v1424, %v1422
        %v1473 = vpack.c.b16 %v1425, %v1423
        %v1474 = vpack.c.b16 %v1428, %v1426
        %v1475 = vpack.c.b16 %v1429, %v1427
        %v1476 = vpack.c.b16 %v1432, %v1430
        %v1477 = vpack.c.b16 %v1433, %v1431
        %v1478 = vpack.c.b16 %v1436, %v1434
        %v1479 = vpack.c.b16 %v1437, %v1435
        %v1480 = vpack.c.b16 %v1440, %v1438
        %v1481 = vpack.c.b16 %v1441, %v1439
        %v1482 = vpack.c.b16 %v1444, %v1442
        %v1483 = vpack.c.b16 %v1445, %v1443
        %v1484 = vpack.c.b16 %v1448, %v1446
        %v1485 = vpack.c.b16 %v1449, %v1447
        %v1486 = vpack.c.b16 %v1452, %v1450
        %v1487 = vpack.c.b16 %v1453, %v1451
        %v1488 = vpack.c.b16 %v1456, %v1454
        %v1489 = vpack.c.b16 %v1457, %v1455
        %1522 = vmatprep.subr.bf16.mxu0 %v1459
        %1523 = vmatpush1.bf16.msra.mxu0 %v1458
        %1524 = vmatprep.subr.bf16.mxu0 %v1461
        %1525 = vmatpush1.bf16.msra.mxu0 %v1460
        %1526 = vmatprep.subr.bf16.mxu0 %v1463
        %1527 = vmatpush1.bf16.msra.mxu0 %v1462
        %1528 = vmatprep.subr.bf16.mxu0 %v1465
        %1529 = vmatpush1.bf16.msra.mxu0 %v1464
        %1530 = vmatprep.subr.bf16.mxu0 %v1467
        %1531 = vmatpush1.bf16.msra.mxu0 %v1466
        %1532 = vmatprep.subr.bf16.mxu0 %v1469
        %1533 = vmatpush1.bf16.msra.mxu0 %v1468
        %1534 = vmatprep.subr.bf16.mxu0 %v1471
        %1535 = vmatpush1.bf16.msra.mxu0 %v1470
        %1536 = vmatprep.subr.bf16.mxu0 %v1473
        %1537 = vmatpush1.bf16.msra.mxu0 %v1472
        %1538 = vmatprep.subr.bf16.mxu0 %v1475
        %1539 = vmatpush1.bf16.msra.mxu0 %v1474
        %1540 = vmatprep.subr.bf16.mxu0 %v1477
        %1541 = vmatpush1.bf16.msra.mxu0 %v1476
        %1542 = vmatprep.subr.bf16.mxu0 %v1479
        %1543 = vmatpush1.bf16.msra.mxu0 %v1478
        %1544 = vmatprep.subr.bf16.mxu0 %v1481
        %1545 = vmatpush1.bf16.msra.mxu0 %v1480
        %1546 = vmatprep.subr.bf16.mxu0 %v1483
        %1547 = vmatpush1.bf16.msra.mxu0 %v1482
        %1548 = vmatprep.subr.bf16.mxu0 %v1485
        %1549 = vmatpush1.bf16.msra.mxu0 %v1484
        %1550 = vmatprep.subr.bf16.mxu0 %v1487
        %1551 = vmatpush1.bf16.msra.mxu0 %v1486
        %1552 = vmatprep.subr.bf16.mxu0 %v1489
        %1553 = vmatpush1.bf16.msra.mxu0 %v1488
        %1554 = vmatprep.mubr.bf16.mxu0 %v1359
        %1555 = vmatmul.mubr.bf16.gmra.mrb[0].mxu0 %v1347
        %v1556 = vpop.f32.mrb[0].mxu0
        %v1557 = vadd.f32 0.0, %v1556
        %v1558 = vpop.f32.mrb[0].mxu0
        %v1559 = vadd.f32 0.0, %v1558
        %v1560 = vpop.f32.mrb[0].mxu0
        %v1561 = vadd.f32 0.0, %v1560
        %v1562 = vpop.f32.mrb[0].mxu0
        %v1563 = vadd.f32 0.0, %v1562
        %1564 = vdwg.mxu0
        %v1565 = vadd.f32 %v1283, %v1557
        %v1566 = vadd.f32 %v1284, %v1559
        %v1567 = vadd.f32 %v1285, %v1561
        %v1568 = vadd.f32 %v1286, %v1563
        %v1569 = vld [vmem:[%s201 + $0x8] sm:$0xee]
        %s1570 = scalar_lea.vmem [#allocation4], 1280
        %v1571 = vld [vmem:[%s1570] sm:$0xff]
        %v1572 = vld [vmem:[%s1570 + $0x8] sm:$0xff]
        %v1573 = vld [vmem:[%s1570 + $0x10] sm:$0xff]
        %v1574 = vld [vmem:[%s1570 + $0x18] sm:$0xff]
        %v1575 = vld [vmem:[%s1570 + $0x20] sm:$0xff]
        %v1576 = vld [vmem:[%s1570 + $0x28] sm:$0xff]
        %v1577 = vld [vmem:[%s1570 + $0x30] sm:$0xff]
        %v1578 = vld [vmem:[%s1570 + $0x38] sm:$0xff]
        %v1579 = vld [vmem:[%s1570 + $0x40] sm:$0xff]
        %v1580 = vld [vmem:[%s1570 + $0x48] sm:$0xff]
        %v1581 = vld [vmem:[%s1570 + $0x50] sm:$0xff]
        %v1582 = vld [vmem:[%s1570 + $0x58] sm:$0xff]
        %v1583 = vld [vmem:[%s1570 + $0x60] sm:$0xff]
        %v1584 = vld [vmem:[%s1570 + $0x68] sm:$0xff]
        %v1585 = vld [vmem:[%s1570 + $0x70] sm:$0xff]
        %v1586 = vld [vmem:[%s1570 + $0x78] sm:$0xff]
        %v1587 = vld [vmem:[%s1570 + $0x80] sm:$0xff]
        %v1588 = vld [vmem:[%s1570 + $0x88] sm:$0xff]
        %v1589 = vld [vmem:[%s1570 + $0x90] sm:$0xff]
        %v1590 = vld [vmem:[%s1570 + $0x98] sm:$0xff]
        %v1591 = vld [vmem:[%s1570 + $0xa0] sm:$0xff]
        %v1592 = vld [vmem:[%s1570 + $0xa8] sm:$0xff]
        %v1593 = vld [vmem:[%s1570 + $0xb0] sm:$0xff]
        %v1594 = vld [vmem:[%s1570 + $0xb8] sm:$0xff]
        %v1595 = vld [vmem:[%s1570 + $0xc0] sm:$0xff]
        %v1596 = vld [vmem:[%s1570 + $0xc8] sm:$0xff]
        %v1597 = vld [vmem:[%s1570 + $0xd0] sm:$0xff]
        %v1598 = vld [vmem:[%s1570 + $0xd8] sm:$0xff]
        %v1599 = vld [vmem:[%s1570 + $0xe0] sm:$0xff]
        %v1600 = vld [vmem:[%s1570 + $0xe8] sm:$0xff]
        %v1601 = vld [vmem:[%s1570 + $0xf0] sm:$0xff]
        %v1602 = vld [vmem:[%s1570 + $0xf8] sm:$0xff]
        %v1604 = vunpack.c.l.b16 %v1569
        %v1605 = vunpack.c.h.b16 %v1569
        %v1606 = vpack.c.b16 %v1328, %v1604
        %v1607 = vpack.c.b16 %v1329, %v1605
        %v1608 = vrot.slane %v1606, 1
        %v1609 = vrot.slane %v1334, 1
        %v1610 = vsel %vm823, %v1608, %v1609
        %v1611 = vrot.slane %v1607, 1
        %v1612 = vrot.slane %v1335, 1
        %v1613 = vsel %vm823, %v1611, %v1612
        %v1648 = vunpack.c.l.b16 %v1571
        %v1649 = vunpack.c.h.b16 %v1571
        %v1650 = vunpack.c.l.b16 %v1572
        %v1651 = vunpack.c.h.b16 %v1572
        %v1652 = vunpack.c.l.b16 %v1573
        %v1653 = vunpack.c.h.b16 %v1573
        %v1654 = vunpack.c.l.b16 %v1574
        %v1655 = vunpack.c.h.b16 %v1574
        %v1656 = vunpack.c.l.b16 %v1575
        %v1657 = vunpack.c.h.b16 %v1575
        %v1658 = vunpack.c.l.b16 %v1576
        %v1659 = vunpack.c.h.b16 %v1576
        %v1660 = vunpack.c.l.b16 %v1577
        %v1661 = vunpack.c.h.b16 %v1577
        %v1662 = vunpack.c.l.b16 %v1578
        %v1663 = vunpack.c.h.b16 %v1578
        %v1664 = vunpack.c.l.b16 %v1579
        %v1665 = vunpack.c.h.b16 %v1579
        %v1666 = vunpack.c.l.b16 %v1580
        %v1667 = vunpack.c.h.b16 %v1580
        %v1668 = vunpack.c.l.b16 %v1581
        %v1669 = vunpack.c.h.b16 %v1581
        %v1670 = vunpack.c.l.b16 %v1582
        %v1671 = vunpack.c.h.b16 %v1582
        %v1672 = vunpack.c.l.b16 %v1583
        %v1673 = vunpack.c.h.b16 %v1583
        %v1674 = vunpack.c.l.b16 %v1584
        %v1675 = vunpack.c.h.b16 %v1584
        %v1676 = vunpack.c.l.b16 %v1585
        %v1677 = vunpack.c.h.b16 %v1585
        %v1678 = vunpack.c.l.b16 %v1586
        %v1679 = vunpack.c.h.b16 %v1586
        %v1680 = vunpack.c.l.b16 %v1587
        %v1681 = vunpack.c.h.b16 %v1587
        %v1682 = vunpack.c.l.b16 %v1588
        %v1683 = vunpack.c.h.b16 %v1588
        %v1684 = vunpack.c.l.b16 %v1589
        %v1685 = vunpack.c.h.b16 %v1589
        %v1686 = vunpack.c.l.b16 %v1590
        %v1687 = vunpack.c.h.b16 %v1590
        %v1688 = vunpack.c.l.b16 %v1591
        %v1689 = vunpack.c.h.b16 %v1591
        %v1690 = vunpack.c.l.b16 %v1592
        %v1691 = vunpack.c.h.b16 %v1592
        %v1692 = vunpack.c.l.b16 %v1593
        %v1693 = vunpack.c.h.b16 %v1593
        %v1694 = vunpack.c.l.b16 %v1594
        %v1695 = vunpack.c.h.b16 %v1594
        %v1696 = vunpack.c.l.b16 %v1595
        %v1697 = vunpack.c.h.b16 %v1595
        %v1698 = vunpack.c.l.b16 %v1596
        %v1699 = vunpack.c.h.b16 %v1596
        %v1700 = vunpack.c.l.b16 %v1597
        %v1701 = vunpack.c.h.b16 %v1597
        %v1702 = vunpack.c.l.b16 %v1598
        %v1703 = vunpack.c.h.b16 %v1598
        %v1704 = vunpack.c.l.b16 %v1599
        %v1705 = vunpack.c.h.b16 %v1599
        %v1706 = vunpack.c.l.b16 %v1600
        %v1707 = vunpack.c.h.b16 %v1600
        %v1708 = vunpack.c.l.b16 %v1601
        %v1709 = vunpack.c.h.b16 %v1601
        %v1710 = vunpack.c.l.b16 %v1602
        %v1711 = vunpack.c.h.b16 %v1602
        %v1712 = vpack.c.b16 %v1650, %v1648
        %v1713 = vpack.c.b16 %v1651, %v1649
        %v1714 = vpack.c.b16 %v1654, %v1652
        %v1715 = vpack.c.b16 %v1655, %v1653
        %v1716 = vpack.c.b16 %v1658, %v1656
        %v1717 = vpack.c.b16 %v1659, %v1657
        %v1718 = vpack.c.b16 %v1662, %v1660
        %v1719 = vpack.c.b16 %v1663, %v1661
        %v1720 = vpack.c.b16 %v1666, %v1664
        %v1721 = vpack.c.b16 %v1667, %v1665
        %v1722 = vpack.c.b16 %v1670, %v1668
        %v1723 = vpack.c.b16 %v1671, %v1669
        %v1724 = vpack.c.b16 %v1674, %v1672
        %v1725 = vpack.c.b16 %v1675, %v1673
        %v1726 = vpack.c.b16 %v1678, %v1676
        %v1727 = vpack.c.b16 %v1679, %v1677
        %v1728 = vpack.c.b16 %v1682, %v1680
        %v1729 = vpack.c.b16 %v1683, %v1681
        %v1730 = vpack.c.b16 %v1686, %v1684
        %v1731 = vpack.c.b16 %v1687, %v1685
        %v1732 = vpack.c.b16 %v1690, %v1688
        %v1733 = vpack.c.b16 %v1691, %v1689
        %v1734 = vpack.c.b16 %v1694, %v1692
        %v1735 = vpack.c.b16 %v1695, %v1693
        %v1736 = vpack.c.b16 %v1698, %v1696
        %v1737 = vpack.c.b16 %v1699, %v1697
        %v1738 = vpack.c.b16 %v1702, %v1700
        %v1739 = vpack.c.b16 %v1703, %v1701
        %v1740 = vpack.c.b16 %v1706, %v1704
        %v1741 = vpack.c.b16 %v1707, %v1705
        %v1742 = vpack.c.b16 %v1710, %v1708
        %v1743 = vpack.c.b16 %v1711, %v1709
        %1776 = vmatprep.subr.bf16.mxu0 %v1713
        %1777 = vmatpush1.bf16.msra.mxu0 %v1712
        %1778 = vmatprep.subr.bf16.mxu0 %v1715
        %1779 = vmatpush1.bf16.msra.mxu0 %v1714
        %1780 = vmatprep.subr.bf16.mxu0 %v1717
        %1781 = vmatpush1.bf16.msra.mxu0 %v1716
        %1782 = vmatprep.subr.bf16.mxu0 %v1719
        %1783 = vmatpush1.bf16.msra.mxu0 %v1718
        %1784 = vmatprep.subr.bf16.mxu0 %v1721
        %1785 = vmatpush1.bf16.msra.mxu0 %v1720
        %1786 = vmatprep.subr.bf16.mxu0 %v1723
        %1787 = vmatpush1.bf16.msra.mxu0 %v1722
        %1788 = vmatprep.subr.bf16.mxu0 %v1725
        %1789 = vmatpush1.bf16.msra.mxu0 %v1724
        %1790 = vmatprep.subr.bf16.mxu0 %v1727
        %1791 = vmatpush1.bf16.msra.mxu0 %v1726
        %1792 = vmatprep.subr.bf16.mxu0 %v1729
        %1793 = vmatpush1.bf16.msra.mxu0 %v1728
        %1794 = vmatprep.subr.bf16.mxu0 %v1731
        %1795 = vmatpush1.bf16.msra.mxu0 %v1730
        %1796 = vmatprep.subr.bf16.mxu0 %v1733
        %1797 = vmatpush1.bf16.msra.mxu0 %v1732
        %1798 = vmatprep.subr.bf16.mxu0 %v1735
        %1799 = vmatpush1.bf16.msra.mxu0 %v1734
        %1800 = vmatprep.subr.bf16.mxu0 %v1737
        %1801 = vmatpush1.bf16.msra.mxu0 %v1736
        %1802 = vmatprep.subr.bf16.mxu0 %v1739
        %1803 = vmatpush1.bf16.msra.mxu0 %v1738
        %1804 = vmatprep.subr.bf16.mxu0 %v1741
        %1805 = vmatpush1.bf16.msra.mxu0 %v1740
        %1806 = vmatprep.subr.bf16.mxu0 %v1743
        %1807 = vmatpush1.bf16.msra.mxu0 %v1742
        %1808 = vmatprep.mubr.bf16.mxu0 %v1613
        %1809 = vmatmul.mubr.bf16.gmra.mrb[0].mxu0 %v1610
        %v1810 = vpop.f32.mrb[0].mxu0
        %v1811 = vadd.f32 0.0, %v1810
        %v1812 = vpop.f32.mrb[0].mxu0
        %v1813 = vadd.f32 0.0, %v1812
        %v1814 = vpop.f32.mrb[0].mxu0
        %v1815 = vadd.f32 0.0, %v1814
        %v1816 = vpop.f32.mrb[0].mxu0
        %v1817 = vadd.f32 0.0, %v1816
        %1818 = vdwg.mxu0
        %v1819 = vadd.f32 %v1565, %v1811
        %v1820 = vadd.f32 %v1566, %v1813
        %v1821 = vadd.f32 %v1567, %v1815
        %v1822 = vadd.f32 %v1568, %v1817
        %v1823 = vld [vmem:[%s201 + $0x18] sm:$0xff]
        %s1824 = scalar_lea.vmem [#allocation4], 1536
        %v1825 = vld [vmem:[%s1824] sm:$0xff]
        %v1826 = vld [vmem:[%s1824 + $0x8] sm:$0xff]
        %v1827 = vld [vmem:[%s1824 + $0x10] sm:$0xff]
        %v1828 = vld [vmem:[%s1824 + $0x18] sm:$0xff]
        %v1829 = vld [vmem:[%s1824 + $0x20] sm:$0xff]
        %v1830 = vld [vmem:[%s1824 + $0x28] sm:$0xff]
        %v1831 = vld [vmem:[%s1824 + $0x30] sm:$0xff]
        %v1832 = vld [vmem:[%s1824 + $0x38] sm:$0xff]
        %v1833 = vld [vmem:[%s1824 + $0x40] sm:$0xff]
        %v1834 = vld [vmem:[%s1824 + $0x48] sm:$0xff]
        %v1835 = vld [vmem:[%s1824 + $0x50] sm:$0xff]
        %v1836 = vld [vmem:[%s1824 + $0x58] sm:$0xff]
        %v1837 = vld [vmem:[%s1824 + $0x60] sm:$0xff]
        %v1838 = vld [vmem:[%s1824 + $0x68] sm:$0xff]
        %v1839 = vld [vmem:[%s1824 + $0x70] sm:$0xff]
        %v1840 = vld [vmem:[%s1824 + $0x78] sm:$0xff]
        %v1841 = vld [vmem:[%s1824 + $0x80] sm:$0xff]
        %v1842 = vld [vmem:[%s1824 + $0x88] sm:$0xff]
        %v1843 = vld [vmem:[%s1824 + $0x90] sm:$0xff]
        %v1844 = vld [vmem:[%s1824 + $0x98] sm:$0xff]
        %v1845 = vld [vmem:[%s1824 + $0xa0] sm:$0xff]
        %v1846 = vld [vmem:[%s1824 + $0xa8] sm:$0xff]
        %v1847 = vld [vmem:[%s1824 + $0xb0] sm:$0xff]
        %v1848 = vld [vmem:[%s1824 + $0xb8] sm:$0xff]
        %v1849 = vld [vmem:[%s1824 + $0xc0] sm:$0xff]
        %v1850 = vld [vmem:[%s1824 + $0xc8] sm:$0xff]
        %v1851 = vld [vmem:[%s1824 + $0xd0] sm:$0xff]
        %v1852 = vld [vmem:[%s1824 + $0xd8] sm:$0xff]
        %v1853 = vld [vmem:[%s1824 + $0xe0] sm:$0xff]
        %v1854 = vld [vmem:[%s1824 + $0xe8] sm:$0xff]
        %v1855 = vld [vmem:[%s1824 + $0xf0] sm:$0xff]
        %v1856 = vld [vmem:[%s1824 + $0xf8] sm:$0xff]
        %v1858 = vunpack.c.l.b16 %v1823
        %v1859 = vunpack.c.h.b16 %v1823
        %v1860 = vpack.c.b16 %v1858, %v1328
        %v1861 = vpack.c.b16 %v1859, %v1329
        %v1896 = vunpack.c.l.b16 %v1825
        %v1897 = vunpack.c.h.b16 %v1825
        %v1898 = vunpack.c.l.b16 %v1826
        %v1899 = vunpack.c.h.b16 %v1826
        %v1900 = vunpack.c.l.b16 %v1827
        %v1901 = vunpack.c.h.b16 %v1827
        %v1902 = vunpack.c.l.b16 %v1828
        %v1903 = vunpack.c.h.b16 %v1828
        %v1904 = vunpack.c.l.b16 %v1829
        %v1905 = vunpack.c.h.b16 %v1829
        %v1906 = vunpack.c.l.b16 %v1830
        %v1907 = vunpack.c.h.b16 %v1830
        %v1908 = vunpack.c.l.b16 %v1831
        %v1909 = vunpack.c.h.b16 %v1831
        %v1910 = vunpack.c.l.b16 %v1832
        %v1911 = vunpack.c.h.b16 %v1832
        %v1912 = vunpack.c.l.b16 %v1833
        %v1913 = vunpack.c.h.b16 %v1833
        %v1914 = vunpack.c.l.b16 %v1834
        %v1915 = vunpack.c.h.b16 %v1834
        %v1916 = vunpack.c.l.b16 %v1835
        %v1917 = vunpack.c.h.b16 %v1835
        %v1918 = vunpack.c.l.b16 %v1836
        %v1919 = vunpack.c.h.b16 %v1836
        %v1920 = vunpack.c.l.b16 %v1837
        %v1921 = vunpack.c.h.b16 %v1837
        %v1922 = vunpack.c.l.b16 %v1838
        %v1923 = vunpack.c.h.b16 %v1838
        %v1924 = vunpack.c.l.b16 %v1839
        %v1925 = vunpack.c.h.b16 %v1839
        %v1926 = vunpack.c.l.b16 %v1840
        %v1927 = vunpack.c.h.b16 %v1840
        %v1928 = vunpack.c.l.b16 %v1841
        %v1929 = vunpack.c.h.b16 %v1841
        %v1930 = vunpack.c.l.b16 %v1842
        %v1931 = vunpack.c.h.b16 %v1842
        %v1932 = vunpack.c.l.b16 %v1843
        %v1933 = vunpack.c.h.b16 %v1843
        %v1934 = vunpack.c.l.b16 %v1844
        %v1935 = vunpack.c.h.b16 %v1844
        %v1936 = vunpack.c.l.b16 %v1845
        %v1937 = vunpack.c.h.b16 %v1845
        %v1938 = vunpack.c.l.b16 %v1846
        %v1939 = vunpack.c.h.b16 %v1846
        %v1940 = vunpack.c.l.b16 %v1847
        %v1941 = vunpack.c.h.b16 %v1847
        %v1942 = vunpack.c.l.b16 %v1848
        %v1943 = vunpack.c.h.b16 %v1848
        %v1944 = vunpack.c.l.b16 %v1849
        %v1945 = vunpack.c.h.b16 %v1849
        %v1946 = vunpack.c.l.b16 %v1850
        %v1947 = vunpack.c.h.b16 %v1850
        %v1948 = vunpack.c.l.b16 %v1851
        %v1949 = vunpack.c.h.b16 %v1851
        %v1950 = vunpack.c.l.b16 %v1852
        %v1951 = vunpack.c.h.b16 %v1852
        %v1952 = vunpack.c.l.b16 %v1853
        %v1953 = vunpack.c.h.b16 %v1853
        %v1954 = vunpack.c.l.b16 %v1854
        %v1955 = vunpack.c.h.b16 %v1854
        %v1956 = vunpack.c.l.b16 %v1855
        %v1957 = vunpack.c.h.b16 %v1855
        %v1958 = vunpack.c.l.b16 %v1856
        %v1959 = vunpack.c.h.b16 %v1856
        %v1960 = vpack.c.b16 %v1898, %v1896
        %v1961 = vpack.c.b16 %v1899, %v1897
        %v1962 = vpack.c.b16 %v1902, %v1900
        %v1963 = vpack.c.b16 %v1903, %v1901
        %v1964 = vpack.c.b16 %v1906, %v1904
        %v1965 = vpack.c.b16 %v1907, %v1905
        %v1966 = vpack.c.b16 %v1910, %v1908
        %v1967 = vpack.c.b16 %v1911, %v1909
        %v1968 = vpack.c.b16 %v1914, %v1912
        %v1969 = vpack.c.b16 %v1915, %v1913
        %v1970 = vpack.c.b16 %v1918, %v1916
        %v1971 = vpack.c.b16 %v1919, %v1917
        %v1972 = vpack.c.b16 %v1922, %v1920
        %v1973 = vpack.c.b16 %v1923, %v1921
        %v1974 = vpack.c.b16 %v1926, %v1924
        %v1975 = vpack.c.b16 %v1927, %v1925
        %v1976 = vpack.c.b16 %v1930, %v1928
        %v1977 = vpack.c.b16 %v1931, %v1929
        %v1978 = vpack.c.b16 %v1934, %v1932
        %v1979 = vpack.c.b16 %v1935, %v1933
        %v1980 = vpack.c.b16 %v1938, %v1936
        %v1981 = vpack.c.b16 %v1939, %v1937
        %v1982 = vpack.c.b16 %v1942, %v1940
        %v1983 = vpack.c.b16 %v1943, %v1941
        %v1984 = vpack.c.b16 %v1946, %v1944
        %v1985 = vpack.c.b16 %v1947, %v1945
        %v1986 = vpack.c.b16 %v1950, %v1948
        %v1987 = vpack.c.b16 %v1951, %v1949
        %v1988 = vpack.c.b16 %v1954, %v1952
        %v1989 = vpack.c.b16 %v1955, %v1953
        %v1990 = vpack.c.b16 %v1958, %v1956
        %v1991 = vpack.c.b16 %v1959, %v1957
        %2024 = vmatprep.subr.bf16.mxu0 %v1961
        %2025 = vmatpush1.bf16.msra.mxu0 %v1960
        %2026 = vmatprep.subr.bf16.mxu0 %v1963
        %2027 = vmatpush1.bf16.msra.mxu0 %v1962
        %2028 = vmatprep.subr.bf16.mxu0 %v1965
        %2029 = vmatpush1.bf16.msra.mxu0 %v1964
        %2030 = vmatprep.subr.bf16.mxu0 %v1967
        %2031 = vmatpush1.bf16.msra.mxu0 %v1966
        %2032 = vmatprep.subr.bf16.mxu0 %v1969
        %2033 = vmatpush1.bf16.msra.mxu0 %v1968
        %2034 = vmatprep.subr.bf16.mxu0 %v1971
        %2035 = vmatpush1.bf16.msra.mxu0 %v1970
        %2036 = vmatprep.subr.bf16.mxu0 %v1973
        %2037 = vmatpush1.bf16.msra.mxu0 %v1972
        %2038 = vmatprep.subr.bf16.mxu0 %v1975
        %2039 = vmatpush1.bf16.msra.mxu0 %v1974
        %2040 = vmatprep.subr.bf16.mxu0 %v1977
        %2041 = vmatpush1.bf16.msra.mxu0 %v1976
        %2042 = vmatprep.subr.bf16.mxu0 %v1979
        %2043 = vmatpush1.bf16.msra.mxu0 %v1978
        %2044 = vmatprep.subr.bf16.mxu0 %v1981
        %2045 = vmatpush1.bf16.msra.mxu0 %v1980
        %2046 = vmatprep.subr.bf16.mxu0 %v1983
        %2047 = vmatpush1.bf16.msra.mxu0 %v1982
        %2048 = vmatprep.subr.bf16.mxu0 %v1985
        %2049 = vmatpush1.bf16.msra.mxu0 %v1984
        %2050 = vmatprep.subr.bf16.mxu0 %v1987
        %2051 = vmatpush1.bf16.msra.mxu0 %v1986
        %2052 = vmatprep.subr.bf16.mxu0 %v1989
        %2053 = vmatpush1.bf16.msra.mxu0 %v1988
        %2054 = vmatprep.subr.bf16.mxu0 %v1991
        %2055 = vmatpush1.bf16.msra.mxu0 %v1990
        %2056 = vmatprep.mubr.bf16.mxu0 %v1861
        %2057 = vmatmul.mubr.bf16.gmra.mrb[0].mxu0 %v1860
        %v2058 = vpop.f32.mrb[0].mxu0
        %v2059 = vadd.f32 0.0, %v2058
        %v2060 = vpop.f32.mrb[0].mxu0
        %v2061 = vadd.f32 0.0, %v2060
        %v2062 = vpop.f32.mrb[0].mxu0
        %v2063 = vadd.f32 0.0, %v2062
        %v2064 = vpop.f32.mrb[0].mxu0
        %v2065 = vadd.f32 0.0, %v2064
        %2066 = vdwg.mxu0
        %v2067 = vadd.f32 %v1819, %v2059
        %v2068 = vadd.f32 %v1820, %v2061
        %v2069 = vadd.f32 %v1821, %v2063
        %v2070 = vadd.f32 %v1822, %v2065
        %v2071 = vld [vmem:[%s201 + $0x10] sm:$0xff]
        %v2072 = vld [vmem:[%s201 + $0x18] sm:$0xff]
        %v2073 = vld [vmem:[%s201 + $0x20] sm:$0x11]
        %s2074 = scalar_lea.vmem [#allocation4], 1792
        %v2075 = vld [vmem:[%s2074] sm:$0xff]
        %v2076 = vld [vmem:[%s2074 + $0x8] sm:$0xff]
        %v2077 = vld [vmem:[%s2074 + $0x10] sm:$0xff]
        %v2078 = vld [vmem:[%s2074 + $0x18] sm:$0xff]
        %v2079 = vld [vmem:[%s2074 + $0x20] sm:$0xff]
        %v2080 = vld [vmem:[%s2074 + $0x28] sm:$0xff]
        %v2081 = vld [vmem:[%s2074 + $0x30] sm:$0xff]
        %v2082 = vld [vmem:[%s2074 + $0x38] sm:$0xff]
        %v2083 = vld [vmem:[%s2074 + $0x40] sm:$0xff]
        %v2084 = vld [vmem:[%s2074 + $0x48] sm:$0xff]
        %v2085 = vld [vmem:[%s2074 + $0x50] sm:$0xff]
        %v2086 = vld [vmem:[%s2074 + $0x58] sm:$0xff]
        %v2087 = vld [vmem:[%s2074 + $0x60] sm:$0xff]
        %v2088 = vld [vmem:[%s2074 + $0x68] sm:$0xff]
        %v2089 = vld [vmem:[%s2074 + $0x70] sm:$0xff]
        %v2090 = vld [vmem:[%s2074 + $0x78] sm:$0xff]
        %v2091 = vld [vmem:[%s2074 + $0x80] sm:$0xff]
        %v2092 = vld [vmem:[%s2074 + $0x88] sm:$0xff]
        %v2093 = vld [vmem:[%s2074 + $0x90] sm:$0xff]
        %v2094 = vld [vmem:[%s2074 + $0x98] sm:$0xff]
        %v2095 = vld [vmem:[%s2074 + $0xa0] sm:$0xff]
        %v2096 = vld [vmem:[%s2074 + $0xa8] sm:$0xff]
        %v2097 = vld [vmem:[%s2074 + $0xb0] sm:$0xff]
        %v2098 = vld [vmem:[%s2074 + $0xb8] sm:$0xff]
        %v2099 = vld [vmem:[%s2074 + $0xc0] sm:$0xff]
        %v2100 = vld [vmem:[%s2074 + $0xc8] sm:$0xff]
        %v2101 = vld [vmem:[%s2074 + $0xd0] sm:$0xff]
        %v2102 = vld [vmem:[%s2074 + $0xd8] sm:$0xff]
        %v2103 = vld [vmem:[%s2074 + $0xe0] sm:$0xff]
        %v2104 = vld [vmem:[%s2074 + $0xe8] sm:$0xff]
        %v2105 = vld [vmem:[%s2074 + $0xf0] sm:$0xff]
        %v2106 = vld [vmem:[%s2074 + $0xf8] sm:$0xff]
        %v2110 = vunpack.c.l.b16 %v2071
        %v2111 = vunpack.c.h.b16 %v2071
        %v2112 = vunpack.c.l.b16 %v2072
        %v2113 = vunpack.c.h.b16 %v2072
        %v2114 = vunpack.c.l.b16 %v2073
        %v2115 = vunpack.c.h.b16 %v2073
        %v2116 = vpack.c.b16 %v2112, %v2110
        %v2117 = vpack.c.b16 %v2113, %v2111
        %v2118 = vpack.c.b16 %v2114, %v2114
        %v2119 = vpack.c.b16 %v2115, %v2115
        %v2121 = vshrl.u32 %v2116, 16
        %v2123 = vshll.u32 %v2116, 16
        %v2125 = vrot.slane %v2123, 1
        %v2126 = vor.u32 %v2121, %v2125
        %v2128 = vshll.u32 %v2118, 16
        %v2130 = vrot.slane %v2128, 1
        %v2131 = vsel %vm550, %v2126, %v2130
        %v2133 = vshrl.u32 %v2117, 16
        %v2135 = vshll.u32 %v2117, 16
        %v2137 = vrot.slane %v2135, 1
        %v2138 = vor.u32 %v2133, %v2137
        %v2140 = vshll.u32 %v2119, 16
        %v2142 = vrot.slane %v2140, 1
        %v2143 = vsel %vm550, %v2138, %v2142
        %v2178 = vunpack.c.l.b16 %v2075
        %v2179 = vunpack.c.h.b16 %v2075
        %v2180 = vunpack.c.l.b16 %v2076
        %v2181 = vunpack.c.h.b16 %v2076
        %v2182 = vunpack.c.l.b16 %v2077
        %v2183 = vunpack.c.h.b16 %v2077
        %v2184 = vunpack.c.l.b16 %v2078
        %v2185 = vunpack.c.h.b16 %v2078
        %v2186 = vunpack.c.l.b16 %v2079
        %v2187 = vunpack.c.h.b16 %v2079
        %v2188 = vunpack.c.l.b16 %v2080
        %v2189 = vunpack.c.h.b16 %v2080
        %v2190 = vunpack.c.l.b16 %v2081
        %v2191 = vunpack.c.h.b16 %v2081
        %v2192 = vunpack.c.l.b16 %v2082
        %v2193 = vunpack.c.h.b16 %v2082
        %v2194 = vunpack.c.l.b16 %v2083
        %v2195 = vunpack.c.h.b16 %v2083
        %v2196 = vunpack.c.l.b16 %v2084
        %v2197 = vunpack.c.h.b16 %v2084
        %v2198 = vunpack.c.l.b16 %v2085
        %v2199 = vunpack.c.h.b16 %v2085
        %v2200 = vunpack.c.l.b16 %v2086
        %v2201 = vunpack.c.h.b16 %v2086
        %v2202 = vunpack.c.l.b16 %v2087
        %v2203 = vunpack.c.h.b16 %v2087
        %v2204 = vunpack.c.l.b16 %v2088
        %v2205 = vunpack.c.h.b16 %v2088
        %v2206 = vunpack.c.l.b16 %v2089
        %v2207 = vunpack.c.h.b16 %v2089
        %v2208 = vunpack.c.l.b16 %v2090
        %v2209 = vunpack.c.h.b16 %v2090
        %v2210 = vunpack.c.l.b16 %v2091
        %v2211 = vunpack.c.h.b16 %v2091
        %v2212 = vunpack.c.l.b16 %v2092
        %v2213 = vunpack.c.h.b16 %v2092
        %v2214 = vunpack.c.l.b16 %v2093
        %v2215 = vunpack.c.h.b16 %v2093
        %v2216 = vunpack.c.l.b16 %v2094
        %v2217 = vunpack.c.h.b16 %v2094
        %v2218 = vunpack.c.l.b16 %v2095
        %v2219 = vunpack.c.h.b16 %v2095
        %v2220 = vunpack.c.l.b16 %v2096
        %v2221 = vunpack.c.h.b16 %v2096
        %v2222 = vunpack.c.l.b16 %v2097
        %v2223 = vunpack.c.h.b16 %v2097
        %v2224 = vunpack.c.l.b16 %v2098
        %v2225 = vunpack.c.h.b16 %v2098
        %v2226 = vunpack.c.l.b16 %v2099
        %v2227 = vunpack.c.h.b16 %v2099
        %v2228 = vunpack.c.l.b16 %v2100
        %v2229 = vunpack.c.h.b16 %v2100
        %v2230 = vunpack.c.l.b16 %v2101
        %v2231 = vunpack.c.h.b16 %v2101
        %v2232 = vunpack.c.l.b16 %v2102
        %v2233 = vunpack.c.h.b16 %v2102
        %v2234 = vunpack.c.l.b16 %v2103
        %v2235 = vunpack.c.h.b16 %v2103
        %v2236 = vunpack.c.l.b16 %v2104
        %v2237 = vunpack.c.h.b16 %v2104
        %v2238 = vunpack.c.l.b16 %v2105
        %v2239 = vunpack.c.h.b16 %v2105
        %v2240 = vunpack.c.l.b16 %v2106
        %v2241 = vunpack.c.h.b16 %v2106
        %v2242 = vpack.c.b16 %v2180, %v2178
        %v2243 = vpack.c.b16 %v2181, %v2179
        %v2244 = vpack.c.b16 %v2184, %v2182
        %v2245 = vpack.c.b16 %v2185, %v2183
        %v2246 = vpack.c.b16 %v2188, %v2186
        %v2247 = vpack.c.b16 %v2189, %v2187
        %v2248 = vpack.c.b16 %v2192, %v2190
        %v2249 = vpack.c.b16 %v2193, %v2191
        %v2250 = vpack.c.b16 %v2196, %v2194
        %v2251 = vpack.c.b16 %v2197, %v2195
        %v2252 = vpack.c.b16 %v2200, %v2198
        %v2253 = vpack.c.b16 %v2201, %v2199
        %v2254 = vpack.c.b16 %v2204, %v2202
        %v2255 = vpack.c.b16 %v2205, %v2203
        %v2256 = vpack.c.b16 %v2208, %v2206
        %v2257 = vpack.c.b16 %v2209, %v2207
        %v2258 = vpack.c.b16 %v2212, %v2210
        %v2259 = vpack.c.b16 %v2213, %v2211
        %v2260 = vpack.c.b16 %v2216, %v2214
        %v2261 = vpack.c.b16 %v2217, %v2215
        %v2262 = vpack.c.b16 %v2220, %v2218
        %v2263 = vpack.c.b16 %v2221, %v2219
        %v2264 = vpack.c.b16 %v2224, %v2222
        %v2265 = vpack.c.b16 %v2225, %v2223
        %v2266 = vpack.c.b16 %v2228, %v2226
        %v2267 = vpack.c.b16 %v2229, %v2227
        %v2268 = vpack.c.b16 %v2232, %v2230
        %v2269 = vpack.c.b16 %v2233, %v2231
        %v2270 = vpack.c.b16 %v2236, %v2234
        %v2271 = vpack.c.b16 %v2237, %v2235
        %v2272 = vpack.c.b16 %v2240, %v2238
        %v2273 = vpack.c.b16 %v2241, %v2239
        %2306 = vmatprep.subr.bf16.mxu0 %v2243
        %2307 = vmatpush1.bf16.msra.mxu0 %v2242
        %2308 = vmatprep.subr.bf16.mxu0 %v2245
        %2309 = vmatpush1.bf16.msra.mxu0 %v2244
        %2310 = vmatprep.subr.bf16.mxu0 %v2247
        %2311 = vmatpush1.bf16.msra.mxu0 %v2246
        %2312 = vmatprep.subr.bf16.mxu0 %v2249
        %2313 = vmatpush1.bf16.msra.mxu0 %v2248
        %2314 = vmatprep.subr.bf16.mxu0 %v2251
        %2315 = vmatpush1.bf16.msra.mxu0 %v2250
        %2316 = vmatprep.subr.bf16.mxu0 %v2253
        %2317 = vmatpush1.bf16.msra.mxu0 %v2252
        %2318 = vmatprep.subr.bf16.mxu0 %v2255
        %2319 = vmatpush1.bf16.msra.mxu0 %v2254
        %2320 = vmatprep.subr.bf16.mxu0 %v2257
        %2321 = vmatpush1.bf16.msra.mxu0 %v2256
        %2322 = vmatprep.subr.bf16.mxu0 %v2259
        %2323 = vmatpush1.bf16.msra.mxu0 %v2258
        %2324 = vmatprep.subr.bf16.mxu0 %v2261
        %2325 = vmatpush1.bf16.msra.mxu0 %v2260
        %2326 = vmatprep.subr.bf16.mxu0 %v2263
        %2327 = vmatpush1.bf16.msra.mxu0 %v2262
        %2328 = vmatprep.subr.bf16.mxu0 %v2265
        %2329 = vmatpush1.bf16.msra.mxu0 %v2264
        %2330 = vmatprep.subr.bf16.mxu0 %v2267
        %2331 = vmatpush1.bf16.msra.mxu0 %v2266
        %2332 = vmatprep.subr.bf16.mxu0 %v2269
        %2333 = vmatpush1.bf16.msra.mxu0 %v2268
        %2334 = vmatprep.subr.bf16.mxu0 %v2271
        %2335 = vmatpush1.bf16.msra.mxu0 %v2270
        %2336 = vmatprep.subr.bf16.mxu0 %v2273
        %2337 = vmatpush1.bf16.msra.mxu0 %v2272
        %2338 = vmatprep.mubr.bf16.mxu0 %v2143
        %2339 = vmatmul.mubr.bf16.gmra.mrb[0].mxu0 %v2131
        %v2340 = vpop.f32.mrb[0].mxu0
        %v2341 = vadd.f32 0.0, %v2340
        %v2342 = vpop.f32.mrb[0].mxu0
        %v2343 = vadd.f32 0.0, %v2342
        %v2344 = vpop.f32.mrb[0].mxu0
        %v2345 = vadd.f32 0.0, %v2344
        %v2346 = vpop.f32.mrb[0].mxu0
        %v2347 = vadd.f32 0.0, %v2346
        %2348 = vdwg.mxu0
        %v2349 = vadd.f32 %v2067, %v2341
        %v2350 = vadd.f32 %v2068, %v2343
        %v2351 = vadd.f32 %v2069, %v2345
        %v2352 = vadd.f32 %v2070, %v2347
        %v2353 = vld [vmem:[%s201 + $0x10] sm:$0xee]
        %s2354 = scalar_lea.vmem [#allocation4], 2048
        %v2355 = vld [vmem:[%s2354] sm:$0xff]
        %v2356 = vld [vmem:[%s2354 + $0x8] sm:$0xff]
        %v2357 = vld [vmem:[%s2354 + $0x10] sm:$0xff]
        %v2358 = vld [vmem:[%s2354 + $0x18] sm:$0xff]
        %v2359 = vld [vmem:[%s2354 + $0x20] sm:$0xff]
        %v2360 = vld [vmem:[%s2354 + $0x28] sm:$0xff]
        %v2361 = vld [vmem:[%s2354 + $0x30] sm:$0xff]
        %v2362 = vld [vmem:[%s2354 + $0x38] sm:$0xff]
        %v2363 = vld [vmem:[%s2354 + $0x40] sm:$0xff]
        %v2364 = vld [vmem:[%s2354 + $0x48] sm:$0xff]
        %v2365 = vld [vmem:[%s2354 + $0x50] sm:$0xff]
        %v2366 = vld [vmem:[%s2354 + $0x58] sm:$0xff]
        %v2367 = vld [vmem:[%s2354 + $0x60] sm:$0xff]
        %v2368 = vld [vmem:[%s2354 + $0x68] sm:$0xff]
        %v2369 = vld [vmem:[%s2354 + $0x70] sm:$0xff]
        %v2370 = vld [vmem:[%s2354 + $0x78] sm:$0xff]
        %v2371 = vld [vmem:[%s2354 + $0x80] sm:$0xff]
        %v2372 = vld [vmem:[%s2354 + $0x88] sm:$0xff]
        %v2373 = vld [vmem:[%s2354 + $0x90] sm:$0xff]
        %v2374 = vld [vmem:[%s2354 + $0x98] sm:$0xff]
        %v2375 = vld [vmem:[%s2354 + $0xa0] sm:$0xff]
        %v2376 = vld [vmem:[%s2354 + $0xa8] sm:$0xff]
        %v2377 = vld [vmem:[%s2354 + $0xb0] sm:$0xff]
        %v2378 = vld [vmem:[%s2354 + $0xb8] sm:$0xff]
        %v2379 = vld [vmem:[%s2354 + $0xc0] sm:$0xff]
        %v2380 = vld [vmem:[%s2354 + $0xc8] sm:$0xff]
        %v2381 = vld [vmem:[%s2354 + $0xd0] sm:$0xff]
        %v2382 = vld [vmem:[%s2354 + $0xd8] sm:$0xff]
        %v2383 = vld [vmem:[%s2354 + $0xe0] sm:$0xff]
        %v2384 = vld [vmem:[%s2354 + $0xe8] sm:$0xff]
        %v2385 = vld [vmem:[%s2354 + $0xf0] sm:$0xff]
        %v2386 = vld [vmem:[%s2354 + $0xf8] sm:$0xff]
        %v2388 = vunpack.c.l.b16 %v2353
        %v2389 = vunpack.c.h.b16 %v2353
        %v2390 = vpack.c.b16 %v2112, %v2388
        %v2391 = vpack.c.b16 %v2113, %v2389
        %v2392 = vrot.slane %v2390, 1
        %v2393 = vrot.slane %v2118, 1
        %v2394 = vsel %vm823, %v2392, %v2393
        %v2395 = vrot.slane %v2391, 1
        %v2396 = vrot.slane %v2119, 1
        %v2397 = vsel %vm823, %v2395, %v2396
        %v2432 = vunpack.c.l.b16 %v2355
        %v2433 = vunpack.c.h.b16 %v2355
        %v2434 = vunpack.c.l.b16 %v2356
        %v2435 = vunpack.c.h.b16 %v2356
        %v2436 = vunpack.c.l.b16 %v2357
        %v2437 = vunpack.c.h.b16 %v2357
        %v2438 = vunpack.c.l.b16 %v2358
        %v2439 = vunpack.c.h.b16 %v2358
        %v2440 = vunpack.c.l.b16 %v2359
        %v2441 = vunpack.c.h.b16 %v2359
        %v2442 = vunpack.c.l.b16 %v2360
        %v2443 = vunpack.c.h.b16 %v2360
        %v2444 = vunpack.c.l.b16 %v2361
        %v2445 = vunpack.c.h.b16 %v2361
        %v2446 = vunpack.c.l.b16 %v2362
        %v2447 = vunpack.c.h.b16 %v2362
        %v2448 = vunpack.c.l.b16 %v2363
        %v2449 = vunpack.c.h.b16 %v2363
        %v2450 = vunpack.c.l.b16 %v2364
        %v2451 = vunpack.c.h.b16 %v2364
        %v2452 = vunpack.c.l.b16 %v2365
        %v2453 = vunpack.c.h.b16 %v2365
        %v2454 = vunpack.c.l.b16 %v2366
        %v2455 = vunpack.c.h.b16 %v2366
        %v2456 = vunpack.c.l.b16 %v2367
        %v2457 = vunpack.c.h.b16 %v2367
        %v2458 = vunpack.c.l.b16 %v2368
        %v2459 = vunpack.c.h.b16 %v2368
        %v2460 = vunpack.c.l.b16 %v2369
        %v2461 = vunpack.c.h.b16 %v2369
        %v2462 = vunpack.c.l.b16 %v2370
        %v2463 = vunpack.c.h.b16 %v2370
        %v2464 = vunpack.c.l.b16 %v2371
        %v2465 = vunpack.c.h.b16 %v2371
        %v2466 = vunpack.c.l.b16 %v2372
        %v2467 = vunpack.c.h.b16 %v2372
        %v2468 = vunpack.c.l.b16 %v2373
        %v2469 = vunpack.c.h.b16 %v2373
        %v2470 = vunpack.c.l.b16 %v2374
        %v2471 = vunpack.c.h.b16 %v2374
        %v2472 = vunpack.c.l.b16 %v2375
        %v2473 = vunpack.c.h.b16 %v2375
        %v2474 = vunpack.c.l.b16 %v2376
        %v2475 = vunpack.c.h.b16 %v2376
        %v2476 = vunpack.c.l.b16 %v2377
        %v2477 = vunpack.c.h.b16 %v2377
        %v2478 = vunpack.c.l.b16 %v2378
        %v2479 = vunpack.c.h.b16 %v2378
        %v2480 = vunpack.c.l.b16 %v2379
        %v2481 = vunpack.c.h.b16 %v2379
        %v2482 = vunpack.c.l.b16 %v2380
        %v2483 = vunpack.c.h.b16 %v2380
        %v2484 = vunpack.c.l.b16 %v2381
        %v2485 = vunpack.c.h.b16 %v2381
        %v2486 = vunpack.c.l.b16 %v2382
        %v2487 = vunpack.c.h.b16 %v2382
        %v2488 = vunpack.c.l.b16 %v2383
        %v2489 = vunpack.c.h.b16 %v2383
        %v2490 = vunpack.c.l.b16 %v2384
        %v2491 = vunpack.c.h.b16 %v2384
        %v2492 = vunpack.c.l.b16 %v2385
        %v2493 = vunpack.c.h.b16 %v2385
        %v2494 = vunpack.c.l.b16 %v2386
        %v2495 = vunpack.c.h.b16 %v2386
        %v2496 = vpack.c.b16 %v2434, %v2432
        %v2497 = vpack.c.b16 %v2435, %v2433
        %v2498 = vpack.c.b16 %v2438, %v2436
        %v2499 = vpack.c.b16 %v2439, %v2437
        %v2500 = vpack.c.b16 %v2442, %v2440
        %v2501 = vpack.c.b16 %v2443, %v2441
        %v2502 = vpack.c.b16 %v2446, %v2444
        %v2503 = vpack.c.b16 %v2447, %v2445
        %v2504 = vpack.c.b16 %v2450, %v2448
        %v2505 = vpack.c.b16 %v2451, %v2449
        %v2506 = vpack.c.b16 %v2454, %v2452
        %v2507 = vpack.c.b16 %v2455, %v2453
        %v2508 = vpack.c.b16 %v2458, %v2456
        %v2509 = vpack.c.b16 %v2459, %v2457
        %v2510 = vpack.c.b16 %v2462, %v2460
        %v2511 = vpack.c.b16 %v2463, %v2461
        %v2512 = vpack.c.b16 %v2466, %v2464
        %v2513 = vpack.c.b16 %v2467, %v2465
        %v2514 = vpack.c.b16 %v2470, %v2468
        %v2515 = vpack.c.b16 %v2471, %v2469
        %v2516 = vpack.c.b16 %v2474, %v2472
        %v2517 = vpack.c.b16 %v2475, %v2473
        %v2518 = vpack.c.b16 %v2478, %v2476
        %v2519 = vpack.c.b16 %v2479, %v2477
        %v2520 = vpack.c.b16 %v2482, %v2480
        %v2521 = vpack.c.b16 %v2483, %v2481
        %v2522 = vpack.c.b16 %v2486, %v2484
        %v2523 = vpack.c.b16 %v2487, %v2485
        %v2524 = vpack.c.b16 %v2490, %v2488
        %v2525 = vpack.c.b16 %v2491, %v2489
        %v2526 = vpack.c.b16 %v2494, %v2492
        %v2527 = vpack.c.b16 %v2495, %v2493
        %2560 = vmatprep.subr.bf16.mxu0 %v2497
        %2561 = vmatpush1.bf16.msra.mxu0 %v2496
        %2562 = vmatprep.subr.bf16.mxu0 %v2499
        %2563 = vmatpush1.bf16.msra.mxu0 %v2498
        %2564 = vmatprep.subr.bf16.mxu0 %v2501
        %2565 = vmatpush1.bf16.msra.mxu0 %v2500
        %2566 = vmatprep.subr.bf16.mxu0 %v2503
        %2567 = vmatpush1.bf16.msra.mxu0 %v2502
        %2568 = vmatprep.subr.bf16.mxu0 %v2505
        %2569 = vmatpush1.bf16.msra.mxu0 %v2504
        %2570 = vmatprep.subr.bf16.mxu0 %v2507
        %2571 = vmatpush1.bf16.msra.mxu0 %v2506
        %2572 = vmatprep.subr.bf16.mxu0 %v2509
        %2573 = vmatpush1.bf16.msra.mxu0 %v2508
        %2574 = vmatprep.subr.bf16.mxu0 %v2511
        %2575 = vmatpush1.bf16.msra.mxu0 %v2510
        %2576 = vmatprep.subr.bf16.mxu0 %v2513
        %2577 = vmatpush1.bf16.msra.mxu0 %v2512
        %2578 = vmatprep.subr.bf16.mxu0 %v2515
        %2579 = vmatpush1.bf16.msra.mxu0 %v2514
        %2580 = vmatprep.subr.bf16.mxu0 %v2517
        %2581 = vmatpush1.bf16.msra.mxu0 %v2516
        %2582 = vmatprep.subr.bf16.mxu0 %v2519
        %2583 = vmatpush1.bf16.msra.mxu0 %v2518
        %2584 = vmatprep.subr.bf16.mxu0 %v2521
        %2585 = vmatpush1.bf16.msra.mxu0 %v2520
        %2586 = vmatprep.subr.bf16.mxu0 %v2523
        %2587 = vmatpush1.bf16.msra.mxu0 %v2522
        %2588 = vmatprep.subr.bf16.mxu0 %v2525
        %2589 = vmatpush1.bf16.msra.mxu0 %v2524
        %2590 = vmatprep.subr.bf16.mxu0 %v2527
        %2591 = vmatpush1.bf16.msra.mxu0 %v2526
        %2592 = vmatprep.mubr.bf16.mxu0 %v2397
        %2593 = vmatmul.mubr.bf16.gmra.mrb[0].mxu0 %v2394
        %v2594 = vpop.f32.mrb[0].mxu0
        %v2595 = vadd.f32 0.0, %v2594
        %v2596 = vpop.f32.mrb[0].mxu0
        %v2597 = vadd.f32 0.0, %v2596
        %v2598 = vpop.f32.mrb[0].mxu0
        %v2599 = vadd.f32 0.0, %v2598
        %v2600 = vpop.f32.mrb[0].mxu0
        %v2601 = vadd.f32 0.0, %v2600
        %2602 = vdwg.mxu0
        %v2603 = vadd.f32 %v2349, %v2595
        %v2604 = vadd.f32 %v2350, %v2597
        %v2605 = vadd.f32 %v2351, %v2599
        %v2606 = vadd.f32 %v2352, %v2601
        %vm2607 = vcmp.gt.f32.partialorder %v2603, 0.0
        %vm2608 = vcmp.gt.f32.partialorder %v2604, 0.0
        %vm2609 = vcmp.gt.f32.partialorder %v2605, 0.0
        %vm2610 = vcmp.gt.f32.partialorder %v2606, 0.0
        %v2611 = vmin.f32 %v2603, 0.0
        %v2612 = vmin.f32 %v2604, 0.0
        %v2613 = vmin.f32 %v2605, 0.0
        %v2614 = vmin.f32 %v2606, 0.0
        %v2615 = vmul.f32 %v2611, 1.442695
        %v2616 = vpow.pop %v2615
        %v2617 = vmul.f32 %v2612, 1.442695
        %v2618 = vpow.pop %v2617
        %v2619 = vmul.f32 %v2613, 1.442695
        %v2620 = vpow.pop %v2619
        %v2621 = vmul.f32 %v2614, 1.442695
        %v2622 = vpow.pop %v2621
        %v2623 = vsub.f32 %v2616, 1.0
        %v2624 = vsub.f32 %v2618, 1.0
        %v2625 = vsub.f32 %v2620, 1.0
        %v2626 = vsub.f32 %v2622, 1.0
        %v2627 = vsel %vm2607, %v2603, %v2623
        %v2628 = vsel %vm2608, %v2604, %v2624
        %v2629 = vsel %vm2609, %v2605, %v2625
        %v2630 = vsel %vm2610, %v2606, %v2626
        %v2631 = vpack.c.bf16 %v2627, %v2627
        %v2632 = vpack.c.bf16 %v2628, %v2628
        %v2633 = vpack.c.bf16 %v2629, %v2629
        %v2634 = vpack.c.bf16 %v2630, %v2630
        %v2639 = vunpack.c.l.b16 %v2631
        %v2640 = vunpack.c.l.b16 %v2632
        %v2641 = vunpack.c.l.b16 %v2633
        %v2642 = vunpack.c.l.b16 %v2634
        %v2643 = vpack.c.b16 %v2640, %v2639
        %v2644 = vpack.c.b16 %v2642, %v2641
        %2647 = vst [vmem:[%s164] sm:$0xff] %v2643
        %2648 = vst [vmem:[%s164 + $0x8] sm:$0xff] %v2644
        %s2649 = sand.u32 %s83, 1
        %s2650 = scalar_lea.sflag [#allocation6], %s2649
        %s2651 = sand.u32 %s83, 1
        %s2652 = smul.addr %s2651, 16
        %s2653 = scalar_lea.vmem [#allocation9], %s2652
        // Predicated region
        $region53: #{tpu_custom_call.1} parent=27 // pred_check
          %p2654 = pneg %p93
        $region54: #{tpu_custom_call.1} parent=27 // pred_check_branch
          %2656 = sbr.rel (%p2654) target = $region56
        $region55: #{tpu_custom_call.1} parent=27 // pred_region
          %s2657 = smul.u32 2, %s24
          %s2659 = ssub.s32 256, 256
          %2660 = vsyncadd %s2650, %s2659
          %s2661 = smul.addr %s2657, 2
          %s2662 = smul.addr %s23, 4
          %s2663 = sadd.s32 %s2661, %s2662
          %s2664 = smul.addr %s2663, 64
          %s2665 = scalar_lea.hbm %s3, %s2664
          %s2666 = sshll.u32 %s2653, 4
          %s2667 = int_to_ptr.vmem [resolvable:$true] %s2666
          %2672 = dma.vmem_to_hbm [thread:$0]  %s2667, 256, %s2665, %s2650, 128, 128, 8
        $region56: #{tpu_custom_call.1} parent=27 // pred_fallthru
          _
      $region28: #{tpu_custom_call.1} parent=5 // pred_fallthru
        _
      %p2673 = scmp.le.s32.totalorder 2, %s14
      // Predicated region
      $region57: #{tpu_custom_call.1} parent=5 // pred_check
        %p2674 = pneg %p2673
      $region58: #{tpu_custom_call.1} parent=5 // pred_check_branch
        %2676 = sbr.rel (%p2674) target = $region60
      $region59: #{tpu_custom_call.1} parent=5 // pred_region
        %s2677 = ssub.s32 %s14, 2
        // Predicated region
        $region61: #{tpu_custom_call.1} parent=59 // pred_check
          %p2678 = pneg %p99
        $region62: #{tpu_custom_call.1} parent=59 // pred_check_branch
          %2680 = sbr.rel (%p2678) target = $region64
        $region63: #{tpu_custom_call.1} parent=59 // pred_region
          %s2681 = sand.u32 %s84, 1
          %s2682 = scalar_lea.sflag [#allocation6], %s2681
          %s2683 = sand.u32 %s84, 1
          %s2684 = smul.addr %s2683, 16
          %s2685 = scalar_lea.vmem [#allocation9], %s2684
          %2686 = dma.done %s2682, 256
        $region64: #{tpu_custom_call.1} parent=59 // pred_fallthru
          _
      $region60: #{tpu_custom_call.1} parent=5 // pred_fallthru
        _
    $region6: #{tpu_custom_call.1} parent=1 // loop_footer
      %s18 = sadd.s32 1, %s14
    $region7: #{tpu_custom_call.1} parent=1 // loop_footer_branch
      %13 = sbr.rel target = $region3
    $region8: #{tpu_custom_call.1} parent=1 // loop_exit
      _
    %2687 = vsyncpa [#allocation5], 1
    %s2688 = scalar_lea.sflag [#allocation5], 1
    %2689 = vsyncpa %s2688, 1
    %2690 = vsyncpa [#allocation8], 1
    %2691 = vsyncpa [#allocation6], 1
    %s2692 = scalar_lea.sflag [#allocation6], 1
    %2693 = vsyncpa %s2692, 1
  %2694 = vsyncmov [#allocation3]
  %s2695 = vpop.sfrf %2694
  %p2696 = scmp.eq.s32.totalorder %s2695, 0
  %p2697 = pneg %p2696
  %2699 = shalt.err (%p2697)
  %s2700 = scalar_lea.sflag [#allocation3], 1
  %2701 = vsyncmov %s2700
  %s2702 = vpop.sfrf %2701
  %p2703 = scmp.eq.s32.totalorder %s2702, 0
  %p2704 = pneg %p2703
  %2706 = shalt.err (%p2704)

</llo_original>
